<compile_context>
chip_gen: v7x
topology: tpu7x:2x2x1
jax: 0.10.0
libtpu: 0.0.40
codegen_flags: <defaults>
</compile_context>

<pallas_src>
import functools

import jax
import jax.numpy as jnp
from jax.experimental import pallas as pl
from jax.experimental.pallas import tpu as pltpu


# MXU operand dtype (accumulation is always f32 via preferred_element_type).
# Set to jnp.float32 for bit-exact f32 matmuls.
MXU_DTYPE = jnp.bfloat16


def _dot(a, b):
    """(M,K) @ (K,N) on the MXU with f32 accumulation."""
    return jnp.dot(a.astype(MXU_DTYPE), b.astype(MXU_DTYPE),
                   preferred_element_type=jnp.float32)


def _dot_nt(a, b):
    """(M,K) @ (N,K)^T -> (M,N) without materializing the transpose."""
    return jax.lax.dot_general(a.astype(MXU_DTYPE), b.astype(MXU_DTYPE),
                               (((1,), (1,)), ((), ())),
                               preferred_element_type=jnp.float32)


def _pick_tile(dim, target, granule):
    """Largest tile <= target that divides `dim` and is a multiple of `granule`;
    falls back to the full dim (always legal for BlockSpec)."""
    if dim <= target:
        return dim
    t = (target // granule) * granule
    while t >= granule:
        if dim % t == 0:
            return t
        t -= granule
    return dim


# ------------------------- tiled linear (+ReLU) kernel ----------------------

def _matmul_kernel(x_ref, w_ref, b_ref, o_ref, acc_ref, *, relu):
    k = pl.program_id(2)

    @pl.when(k == 0)
    def _():
        acc_ref[...] = jnp.zeros_like(acc_ref)

    acc_ref[...] += _dot(x_ref[...], w_ref[...])

    @pl.when(k == pl.num_programs(2) - 1)
    def _():
        y = acc_ref[...] + b_ref[...]
        if relu:
            y = jnp.maximum(y, 0.0)
        o_ref[...] = y.astype(o_ref.dtype)


def linear(x2d, w, b, relu=False, tm=256, tn=256, tk=512):
    """y = x @ w + b (w is [in, out]); tiled over (M, N, K) with f32 VMEM accumulator."""
    M, K = x2d.shape
    N = w.shape[1]
    tm = _pick_tile(M, tm, 8)
    tn = _pick_tile(N, tn, 128)
    tk = _pick_tile(K, tk, 128)
    grid = (M // tm, N // tn, K // tk)
    return pl.pallas_call(
        functools.partial(_matmul_kernel, relu=relu),
        out_shape=jax.ShapeDtypeStruct((M, N), jnp.float32),
        grid=grid,
        in_specs=[
            pl.BlockSpec((tm, tk), lambda i, j, k: (i, k)),
            pl.BlockSpec((tk, tn), lambda i, j, k: (k, j)),
            pl.BlockSpec((1, tn), lambda i, j, k: (0, j)),
        ],
        out_specs=pl.BlockSpec((tm, tn), lambda i, j, k: (i, j)),
        scratch_shapes=[pltpu.VMEM((tm, tn), jnp.float32)],
        compiler_params=pltpu.CompilerParams(
            dimension_semantics=("parallel", "parallel", "arbitrary")),
    )(x2d, w, b.reshape(1, N))


# ------------- tiled linear with fused residual + LayerNorm epilogue --------

def _matmul_addln_kernel(x_ref, w_ref, b_ref, r_ref, g_ref, bb_ref, o_ref, acc_ref, *, eps):
    k = pl.program_id(1)

    @pl.when(k == 0)
    def _():
        acc_ref[...] = jnp.zeros_like(acc_ref)

    acc_ref[...] += _dot(x_ref[...], w_ref[...])

    @pl.when(k == pl.num_programs(1) - 1)
    def _():
        y = acc_ref[...] + b_ref[...] + r_ref[...]          # bias + residual
        mean = jnp.mean(y, axis=-1, keepdims=True)
        var = jnp.mean(jnp.square(y - mean), axis=-1, keepdims=True)
        yn = (y - mean) * jax.lax.rsqrt(var + eps)
        o_ref[...] = (yn * g_ref[...] + bb_ref[...]).astype(o_ref.dtype)


def linear_add_layernorm(x2d, w, b, res2d, gamma, beta, eps=1e-5, tm=256, tk=512):
    """LayerNorm(x @ w + b + residual) with the add+LN fused into the matmul epilogue.

    The output N dimension is kept whole per tile (needed for the row reduction)."""
    M, K = x2d.shape
    N = w.shape[1]
    tm = _pick_tile(M, tm, 8)
    tk = _pick_tile(K, tk, 128)
    grid = (M // tm, K // tk)
    return pl.pallas_call(
        functools.partial(_matmul_addln_kernel, eps=eps),
        out_shape=jax.ShapeDtypeStruct((M, N), jnp.float32),
        grid=grid,
        in_specs=[
            pl.BlockSpec((tm, tk), lambda i, k: (i, k)),
            pl.BlockSpec((tk, N), lambda i, k: (k, 0)),
            pl.BlockSpec((1, N), lambda i, k: (0, 0)),
            pl.BlockSpec((tm, N), lambda i, k: (i, 0)),
            pl.BlockSpec((1, N), lambda i, k: (0, 0)),
            pl.BlockSpec((1, N), lambda i, k: (0, 0)),
        ],
        out_specs=pl.BlockSpec((tm, N), lambda i, k: (i, 0)),
        scratch_shapes=[pltpu.VMEM((tm, N), jnp.float32)],
        compiler_params=pltpu.CompilerParams(
            dimension_semantics=("parallel", "arbitrary")),
    )(x2d, w, b.reshape(1, N), res2d, gamma.reshape(1, N), beta.reshape(1, N))


# ------------- fused attention sublayer (QKV + MHA + fc_out + add + LN) -----

def _attn_block_kernel(q_ref, kv_ref, m_ref, wq_ref, wkv_ref, wfc_ref, bfc_ref,
                       g_ref, b_ref, o_ref, *, heads, scale, eps):
    qsrc = q_ref[0]            # (Tq, E)  -- also the residual input
    kvsrc = kv_ref[0]          # (Tk, E)
    mask = m_ref[0]            # (Tq, Tk) float 0/1, shared across heads
    Tq, E = qsrc.shape
    D = E // heads

    # Fold the 1/sqrt(embed_size) softmax scale into q (Tq*E muls instead of Tq*Tk
    # per head; masked entries are overwritten with -1e20 so results are unchanged).
    q = _dot(qsrc, wq_ref[...]) * scale            # (Tq, E)
    kv = _dot(kvsrc, wkv_ref[...])                 # (Tk, 2E)  fused K|V projection
    k = kv[:, :E]
    v = kv[:, E:]
    wfc = wfc_ref[...]                             # (E, E)

    neg = jnp.float32(-1e20)
    y = jnp.zeros((Tq, E), jnp.float32)
    for h in range(heads):                         # static, small H
        sl = slice(h * D, (h + 1) * D)
        e = _dot_nt(q[:, sl], k[:, sl])            # (Tq, Tk)
        e = jnp.where(mask == 0.0, neg, e)
        e = e - jnp.max(e, axis=-1, keepdims=True)
        p = jnp.exp(e)
        p = p * pl.reciprocal(jnp.sum(p, axis=-1, keepdims=True), approx=True)
        oh = _dot(p, v[:, sl])                     # (Tq, D)
        # fc_out(concat(heads)) == sum_h head_h @ wfc[h*D:(h+1)*D, :]
        y = y + _dot(oh, wfc[sl, :])               # (Tq, E)

    y = y + bfc_ref[...] + qsrc                    # fc_out bias + residual
    mean = jnp.mean(y, axis=-1, keepdims=True)
    var = jnp.mean(jnp.square(y - mean), axis=-1, keepdims=True)
    yn = (y - mean) * jax.lax.rsqrt(var + eps)
    o_ref[0] = (yn * g_ref[...] + b_ref[...]).astype(o_ref.dtype)


def _prep_mask(mask, B, Tq, Tk):
    """Per-batch (B, Tq, Tk) float mask; no per-head duplication in HBM."""
    if mask is None:
        return jnp.ones((B, Tq, Tk), jnp.float32)
    m = mask.astype(jnp.float32)
    if m.ndim == 4:            # (B, 1, Tq|1, Tk) -> drop the singleton head dim
        m = m.reshape(B, *m.shape[-2:])
    return jnp.broadcast_to(m, (B, Tq, Tk))


def attention_sublayer(p, q_src, kv_src, mask, gamma, beta, *, heads, embed_size,
                       eps=1e-5):
    """LayerNorm(SelfAttention(kv_src, kv_src, q_src, mask) + q_src), fully fused."""
    B, Tq, E = q_src.shape
    Tk = kv_src.shape[1]
    m = _prep_mask(mask, B, Tq, Tk)
    scale = 1.0 / (float(embed_size) ** 0.5)
    return pl.pallas_call(
        functools.partial(_attn_block_kernel, heads=heads, scale=scale, eps=eps),
        out_shape=jax.ShapeDtypeStruct((B, Tq, E), jnp.float32),
        grid=(B,),
        in_specs=[
            pl.BlockSpec((1, Tq, E), lambda b: (b, 0, 0)),
            pl.BlockSpec((1, Tk, E), lambda b: (b, 0, 0)),
            pl.BlockSpec((1, Tq, Tk), lambda b: (b, 0, 0)),
            pl.BlockSpec((E, E), lambda b: (0, 0)),
            pl.BlockSpec((E, 2 * E), lambda b: (0, 0)),
            pl.BlockSpec((E, E), lambda b: (0, 0)),
            pl.BlockSpec((1, E), lambda b: (0, 0)),
            pl.BlockSpec((1, E), lambda b: (0, 0)),
            pl.BlockSpec((1, E), lambda b: (0, 0)),
        ],
        out_specs=pl.BlockSpec((1, Tq, E), lambda b: (b, 0, 0)),
        compiler_params=pltpu.CompilerParams(dimension_semantics=("parallel",)),
    )(q_src, kv_src, m, p["wq"], p["wkv"], p["w_fc"], p["b_fc"].reshape(1, E),
      gamma.reshape(1, E), beta.reshape(1, E))


# --------------------------- model (glue in JAX) ---------------------------

def decoder_forward(params, x_ids, enc_out, src_mask, target_mask, *, heads, embed_size):
    B, T = x_ids.shape
    E = embed_size
    # Embedding lookups (gather) kept in plain JAX glue; dropout -> identity (eval).
    positions = jnp.arange(T)
    h = params["word_emb"][x_ids] + params["pos_emb"][positions][None, :, :]

    for lp in params["layers"]:
        # DecoderBlock: masked self-attention + fc_out + residual + LayerNorm (fused).
        query = attention_sublayer(lp["mattn"], h, h, target_mask,
                                   lp["norm_g"], lp["norm_b"],
                                   heads=heads, embed_size=E)
        # TransformerBlock: cross-attention (K/V = enc_out) + residual + norm1 (fused).
        x1 = attention_sublayer(lp["attn"], query, enc_out, src_mask,
                                lp["norm1_g"], lp["norm1_b"],
                                heads=heads, embed_size=E)
        # FFN: tiled Linear+ReLU, then Linear with fused residual + norm2 epilogue.
        x1_2d = x1.reshape(B * T, E)
        h1 = linear(x1_2d, lp["ff_w1"], lp["ff_b1"], relu=True)
        h = linear_add_layernorm(h1, lp["ff_w2"], lp["ff_b2"], x1_2d,
                                 lp["norm2_g"], lp["norm2_b"]).reshape(B, T, E)

    # Final vocab projection, padded to a lane-dense multiple of 128 and sliced back.
    vocab = params["fc_w"].shape[1]
    n_pad = ((vocab + 127) // 128) * 128
    fc_w, fc_b = params["fc_w"], params["fc_b"]
    if n_pad != vocab:
        fc_w = jnp.pad(fc_w, ((0, 0), (0, n_pad - vocab)))
        fc_b = jnp.pad(fc_b, (0, n_pad - vocab))
    logits = linear(h.reshape(B * T, E), fc_w, fc_b)[:, :vocab]
    return logits.reshape(B, T, vocab)


# ------------------------------- init params -------------------------------

def _dense(key, shape, scale=0.05):
    return scale * jax.random.normal(key, shape, jnp.float32)


def init_attention_params(key, E):
    k = jax.random.split(key, 5)
    wk = _dense(k[0], (E, E))
    wv = _dense(k[1], (E, E))
    return dict(
        wq=_dense(k[2], (E, E)),
        wkv=jnp.concatenate([wk, wv], axis=1),   # fused K|V projection [E, 2E]
        w_fc=_dense(k[3], (E, E)),
        b_fc=_dense(k[4], (E,)),
    )


def init_decoder_params(key, vocab, max_len, E, heads, num_layers, ffe):
    keys = jax.random.split(key, 3 + num_layers)
    layers = []
    for l in range(num_layers):
        lk = jax.random.split(keys[3 + l], 8)
        layers.append(dict(
            mattn=init_attention_params(lk[0], E),
            norm_g=jnp.ones((E,), jnp.float32),
            norm_b=jnp.zeros((E,), jnp.float32),
            attn=init_attention_params(lk[1], E),
            norm1_g=jnp.ones((E,), jnp.float32),
            norm1_b=jnp.zeros((E,), jnp.float32),
            norm2_g=jnp.ones((E,), jnp.float32),
            norm2_b=jnp.zeros((E,), jnp.float32),
            ff_w1=_dense(lk[2], (E, ffe * E)),
            ff_b1=_dense(lk[3], (ffe * E,)),
            ff_w2=_dense(lk[4], (ffe * E, E)),
            ff_b2=_dense(lk[5], (E,)),
        ))
    return dict(
        word_emb=_dense(keys[0], (vocab, E), scale=1.0),
        pos_emb=_dense(keys[1], (max_len, E), scale=1.0),
        layers=layers,
        fc_w=_dense(keys[2], (E, vocab)),
        fc_b=jnp.zeros((vocab,), jnp.float32),
    )


# ---------------------------------- main -----------------------------------

if __name__ == "__main__":
    B, T_tgt, T_src = 2, 8, 8
    E, heads, num_layers, ffe = 32, 4, 2, 4
    vocab, max_len = 50, 16

    root = jax.random.PRNGKey(0)
    kp, kx, ke = jax.random.split(root, 3)

    params = init_decoder_params(kp, vocab, max_len, E, heads, num_layers, ffe)
    x_ids = jax.random.randint(kx, (B, T_tgt), 0, vocab)
    enc_out = jax.random.normal(ke, (B, T_src, E), jnp.float32)

    # Causal target mask (B, 1, T_tgt, T_tgt); full source mask (B, 1, 1, T_src).
    target_mask = jnp.broadcast_to(
        jnp.tril(jnp.ones((T_tgt, T_tgt), jnp.float32))[None, None],
        (B, 1, T_tgt, T_tgt))
    src_mask = jnp.ones((B, 1, 1, T_src), jnp.float32)

    out = decoder_forward(params, x_ids, enc_out, src_mask, target_mask,
                          heads=heads, embed_size=E)
    jax.block_until_ready(out)
    assert out.shape == (B, T_tgt, vocab), out.shape
    assert bool(jnp.all(jnp.isfinite(out)))
    print("KERNEL_OK")
</pallas_src>

<mosaic_0001>
module attributes {stable_mosaic.version = 11 : i64} {
  func.func @_attn_block_kernel(%arg0: i32, %arg1: memref<1x8x32xf32, #tpu.memory_space<vmem>>, %arg2: memref<1x8x32xf32, #tpu.memory_space<vmem>>, %arg3: memref<1x8x8xf32, #tpu.memory_space<vmem>>, %arg4: memref<32x32xf32, #tpu.memory_space<vmem>>, %arg5: memref<32x64xf32, #tpu.memory_space<vmem>>, %arg6: memref<32x32xf32, #tpu.memory_space<vmem>>, %arg7: memref<1x32xf32, #tpu.memory_space<vmem>>, %arg8: memref<1x32xf32, #tpu.memory_space<vmem>>, %arg9: memref<1x32xf32, #tpu.memory_space<vmem>>, %arg10: memref<1x8x32xf32, #tpu.memory_space<vmem>>) attributes {dimension_semantics = [#tpu.dimension_semantics<parallel>], iteration_bounds = array<i64: 2>, scalar_prefetch = 0 : i64, scratch_operands = 0 : i64, tpu.core_type = #tpu.core_type<tc>, window_params = [{transform_indices = @transform_0, window_bounds = array<i64: 1, 8, 32>}, {transform_indices = @transform_1, window_bounds = array<i64: 1, 8, 32>}, {transform_indices = @transform_2, window_bounds = array<i64: 1, 8, 8>}, {pipeline_mode = #tpu.pipeline_mode<synchronous>, transform_indices = @transform_3, window_bounds = array<i64: 32, 32>}, {pipeline_mode = #tpu.pipeline_mode<synchronous>, transform_indices = @transform_4, window_bounds = array<i64: 32, 64>}, {pipeline_mode = #tpu.pipeline_mode<synchronous>, transform_indices = @transform_5, window_bounds = array<i64: 32, 32>}, {pipeline_mode = #tpu.pipeline_mode<synchronous>, transform_indices = @transform_6, window_bounds = array<i64: 1, 32>}, {pipeline_mode = #tpu.pipeline_mode<synchronous>, transform_indices = @transform_7, window_bounds = array<i64: 1, 32>}, {pipeline_mode = #tpu.pipeline_mode<synchronous>, transform_indices = @transform_8, window_bounds = array<i64: 1, 32>}, {transform_indices = @transform_9, window_bounds = array<i64: 1, 8, 32>}]} {
    %c0 = arith.constant 0 : index
    %c0_0 = arith.constant 0 : index
    %c0_1 = arith.constant 0 : index
    %0 = vector.load %arg1[%c0, %c0_0, %c0_1] : memref<1x8x32xf32, #tpu.memory_space<vmem>>, vector<1x8x32xf32>
    %1 = vector.shape_cast %0 : vector<1x8x32xf32> to vector<8x32xf32>
    %c0_2 = arith.constant 0 : index
    %c0_3 = arith.constant 0 : index
    %c0_4 = arith.constant 0 : index
    %2 = vector.load %arg2[%c0_2, %c0_3, %c0_4] : memref<1x8x32xf32, #tpu.memory_space<vmem>>, vector<1x8x32xf32>
    %3 = vector.shape_cast %2 : vector<1x8x32xf32> to vector<8x32xf32>
    %c0_5 = arith.constant 0 : index
    %c0_6 = arith.constant 0 : index
    %c0_7 = arith.constant 0 : index
    %4 = vector.load %arg3[%c0_5, %c0_6, %c0_7] : memref<1x8x8xf32, #tpu.memory_space<vmem>>, vector<1x8x8xf32>
    %5 = vector.shape_cast %4 : vector<1x8x8xf32> to vector<8x8xf32>
    %c0_8 = arith.constant 0 : index
    %c0_9 = arith.constant 0 : index
    %6 = vector.load %arg4[%c0_8, %c0_9] : memref<32x32xf32, #tpu.memory_space<vmem>>, vector<32x32xf32>
    %7 = arith.truncf %1 : vector<8x32xf32> to vector<8x32xbf16>
    %8 = arith.truncf %6 : vector<32x32xf32> to vector<32x32xbf16>
    %cst = arith.constant dense<0.000000e+00> : vector<8x32xf32>
    %9 = tpu.matmul %7, %8, %cst {dimension_numbers = #tpu.dot_dimension_numbers<[1], [0], [0], [1], [0, 0, 1, 1], [], []>} : vector<8x32xbf16>, vector<32x32xbf16>, vector<8x32xf32> -> vector<8x32xf32>
    %cst_10 = arith.constant 0.176776692 : f32
    %10 = vector.broadcast %cst_10 : f32 to vector<8x32xf32>
    %11 = arith.mulf %9, %10 : vector<8x32xf32>
    %c0_11 = arith.constant 0 : index
    %c0_12 = arith.constant 0 : index
    %12 = vector.load %arg5[%c0_11, %c0_12] : memref<32x64xf32, #tpu.memory_space<vmem>>, vector<32x64xf32>
    %13 = arith.truncf %3 : vector<8x32xf32> to vector<8x32xbf16>
    %14 = arith.truncf %12 : vector<32x64xf32> to vector<32x64xbf16>
    %cst_13 = arith.constant dense<0.000000e+00> : vector<8x64xf32>
    %15 = tpu.matmul %13, %14, %cst_13 {dimension_numbers = #tpu.dot_dimension_numbers<[1], [0], [0], [1], [0, 0, 1, 1], [], []>} : vector<8x32xbf16>, vector<32x64xbf16>, vector<8x64xf32> -> vector<8x64xf32>
    %16 = vector.extract_strided_slice %15 {offsets = [0, 0], sizes = [8, 32], strides = [1, 1]} : vector<8x64xf32> to vector<8x32xf32>
    %17 = vector.extract_strided_slice %15 {offsets = [0, 32], sizes = [8, 32], strides = [1, 1]} : vector<8x64xf32> to vector<8x32xf32>
    %c0_14 = arith.constant 0 : index
    %c0_15 = arith.constant 0 : index
    %18 = vector.load %arg6[%c0_14, %c0_15] : memref<32x32xf32, #tpu.memory_space<vmem>>, vector<32x32xf32>
    %cst_16 = arith.constant 0.000000e+00 : f32
    %19 = vector.broadcast %cst_16 : f32 to vector<8x32xf32>
    %20 = vector.extract_strided_slice %11 {offsets = [0, 0], sizes = [8, 8], strides = [1, 1]} : vector<8x32xf32> to vector<8x8xf32>
    %21 = vector.extract_strided_slice %16 {offsets = [0, 0], sizes = [8, 8], strides = [1, 1]} : vector<8x32xf32> to vector<8x8xf32>
    %22 = arith.truncf %20 : vector<8x8xf32> to vector<8x8xbf16>
    %23 = arith.truncf %21 : vector<8x8xf32> to vector<8x8xbf16>
    %cst_17 = arith.constant dense<0.000000e+00> : vector<8x8xf32>
    %24 = tpu.matmul %22, %23, %cst_17 {dimension_numbers = #tpu.dot_dimension_numbers<[1], [1], [0], [0], [0, 0, 1, 0], [], []>} : vector<8x8xbf16>, vector<8x8xbf16>, vector<8x8xf32> -> vector<8x8xf32>
    %cst_18 = arith.constant 0.000000e+00 : f32
    %25 = vector.broadcast %cst_18 : f32 to vector<8x8xf32>
    %26 = arith.cmpf oeq, %5, %25 : vector<8x8xf32>
    %cst_19 = arith.constant -1.000000e+20 : f32
    %27 = vector.broadcast %cst_19 : f32 to vector<8x8xf32>
    %28 = arith.select %26, %27, %24 : vector<8x8xi1>, vector<8x8xf32>
    %cst_20 = arith.constant dense<0xFF800000> : vector<8xf32>
    %29 = vector.multi_reduction <maximumf>, %28, %cst_20 [1] : vector<8x8xf32> to vector<8xf32>
    %30 = vector.shape_cast %29 : vector<8xf32> to vector<8x1xf32>
    %31 = vector.broadcast %30 : vector<8x1xf32> to vector<8x8xf32>
    %32 = arith.subf %28, %31 : vector<8x8xf32>
    %33 = math.exp %32 : vector<8x8xf32>
    %cst_21 = arith.constant dense<0.000000e+00> : vector<8xf32>
    %34 = vector.multi_reduction <add>, %33, %cst_21 [1] : vector<8x8xf32> to vector<8xf32>
    %35 = vector.shape_cast %34 : vector<8xf32> to vector<8x1xf32>
    %36 = tpu.reciprocal %35 {approx = true} : vector<8x1xf32> -> vector<8x1xf32>
    %37 = vector.broadcast %36 : vector<8x1xf32> to vector<8x8xf32>
    %38 = arith.mulf %33, %37 : vector<8x8xf32>
    %39 = vector.extract_strided_slice %17 {offsets = [0, 0], sizes = [8, 8], strides = [1, 1]} : vector<8x32xf32> to vector<8x8xf32>
    %40 = arith.truncf %38 : vector<8x8xf32> to vector<8x8xbf16>
    %41 = arith.truncf %39 : vector<8x8xf32> to vector<8x8xbf16>
    %cst_22 = arith.constant dense<0.000000e+00> : vector<8x8xf32>
    %42 = tpu.matmul %40, %41, %cst_22 {dimension_numbers = #tpu.dot_dimension_numbers<[1], [0], [0], [1], [0, 0, 1, 1], [], []>} : vector<8x8xbf16>, vector<8x8xbf16>, vector<8x8xf32> -> vector<8x8xf32>
    %43 = vector.extract_strided_slice %18 {offsets = [0, 0], sizes = [8, 32], strides = [1, 1]} : vector<32x32xf32> to vector<8x32xf32>
    %44 = arith.truncf %42 : vector<8x8xf32> to vector<8x8xbf16>
    %45 = arith.truncf %43 : vector<8x32xf32> to vector<8x32xbf16>
    %cst_23 = arith.constant dense<0.000000e+00> : vector<8x32xf32>
    %46 = tpu.matmul %44, %45, %cst_23 {dimension_numbers = #tpu.dot_dimension_numbers<[1], [0], [0], [1], [0, 0, 1, 1], [], []>} : vector<8x8xbf16>, vector<8x32xbf16>, vector<8x32xf32> -> vector<8x32xf32>
    %47 = arith.addf %19, %46 : vector<8x32xf32>
    %48 = vector.extract_strided_slice %11 {offsets = [0, 8], sizes = [8, 8], strides = [1, 1]} : vector<8x32xf32> to vector<8x8xf32>
    %49 = vector.extract_strided_slice %16 {offsets = [0, 8], sizes = [8, 8], strides = [1, 1]} : vector<8x32xf32> to vector<8x8xf32>
    %50 = arith.truncf %48 : vector<8x8xf32> to vector<8x8xbf16>
    %51 = arith.truncf %49 : vector<8x8xf32> to vector<8x8xbf16>
    %cst_24 = arith.constant dense<0.000000e+00> : vector<8x8xf32>
    %52 = tpu.matmul %50, %51, %cst_24 {dimension_numbers = #tpu.dot_dimension_numbers<[1], [1], [0], [0], [0, 0, 1, 0], [], []>} : vector<8x8xbf16>, vector<8x8xbf16>, vector<8x8xf32> -> vector<8x8xf32>
    %cst_25 = arith.constant 0.000000e+00 : f32
    %53 = vector.broadcast %cst_25 : f32 to vector<8x8xf32>
    %54 = arith.cmpf oeq, %5, %53 : vector<8x8xf32>
    %cst_26 = arith.constant -1.000000e+20 : f32
    %55 = vector.broadcast %cst_26 : f32 to vector<8x8xf32>
    %56 = arith.select %54, %55, %52 : vector<8x8xi1>, vector<8x8xf32>
    %cst_27 = arith.constant dense<0xFF800000> : vector<8xf32>
    %57 = vector.multi_reduction <maximumf>, %56, %cst_27 [1] : vector<8x8xf32> to vector<8xf32>
    %58 = vector.shape_cast %57 : vector<8xf32> to vector<8x1xf32>
    %59 = vector.broadcast %58 : vector<8x1xf32> to vector<8x8xf32>
    %60 = arith.subf %56, %59 : vector<8x8xf32>
    %61 = math.exp %60 : vector<8x8xf32>
    %cst_28 = arith.constant dense<0.000000e+00> : vector<8xf32>
    %62 = vector.multi_reduction <add>, %61, %cst_28 [1] : vector<8x8xf32> to vector<8xf32>
    %63 = vector.shape_cast %62 : vector<8xf32> to vector<8x1xf32>
    %64 = tpu.reciprocal %63 {approx = true} : vector<8x1xf32> -> vector<8x1xf32>
    %65 = vector.broadcast %64 : vector<8x1xf32> to vector<8x8xf32>
    %66 = arith.mulf %61, %65 : vector<8x8xf32>
    %67 = vector.extract_strided_slice %17 {offsets = [0, 8], sizes = [8, 8], strides = [1, 1]} : vector<8x32xf32> to vector<8x8xf32>
    %68 = arith.truncf %66 : vector<8x8xf32> to vector<8x8xbf16>
    %69 = arith.truncf %67 : vector<8x8xf32> to vector<8x8xbf16>
    %cst_29 = arith.constant dense<0.000000e+00> : vector<8x8xf32>
    %70 = tpu.matmul %68, %69, %cst_29 {dimension_numbers = #tpu.dot_dimension_numbers<[1], [0], [0], [1], [0, 0, 1, 1], [], []>} : vector<8x8xbf16>, vector<8x8xbf16>, vector<8x8xf32> -> vector<8x8xf32>
    %71 = vector.extract_strided_slice %18 {offsets = [8, 0], sizes = [8, 32], strides = [1, 1]} : vector<32x32xf32> to vector<8x32xf32>
    %72 = arith.truncf %70 : vector<8x8xf32> to vector<8x8xbf16>
    %73 = arith.truncf %71 : vector<8x32xf32> to vector<8x32xbf16>
    %cst_30 = arith.constant dense<0.000000e+00> : vector<8x32xf32>
    %74 = tpu.matmul %72, %73, %cst_30 {dimension_numbers = #tpu.dot_dimension_numbers<[1], [0], [0], [1], [0, 0, 1, 1], [], []>} : vector<8x8xbf16>, vector<8x32xbf16>, vector<8x32xf32> -> vector<8x32xf32>
    %75 = arith.addf %47, %74 : vector<8x32xf32>
    %76 = vector.extract_strided_slice %11 {offsets = [0, 16], sizes = [8, 8], strides = [1, 1]} : vector<8x32xf32> to vector<8x8xf32>
    %77 = vector.extract_strided_slice %16 {offsets = [0, 16], sizes = [8, 8], strides = [1, 1]} : vector<8x32xf32> to vector<8x8xf32>
    %78 = arith.truncf %76 : vector<8x8xf32> to vector<8x8xbf16>
    %79 = arith.truncf %77 : vector<8x8xf32> to vector<8x8xbf16>
    %cst_31 = arith.constant dense<0.000000e+00> : vector<8x8xf32>
    %80 = tpu.matmul %78, %79, %cst_31 {dimension_numbers = #tpu.dot_dimension_numbers<[1], [1], [0], [0], [0, 0, 1, 0], [], []>} : vector<8x8xbf16>, vector<8x8xbf16>, vector<8x8xf32> -> vector<8x8xf32>
    %cst_32 = arith.constant 0.000000e+00 : f32
    %81 = vector.broadcast %cst_32 : f32 to vector<8x8xf32>
    %82 = arith.cmpf oeq, %5, %81 : vector<8x8xf32>
    %cst_33 = arith.constant -1.000000e+20 : f32
    %83 = vector.broadcast %cst_33 : f32 to vector<8x8xf32>
    %84 = arith.select %82, %83, %80 : vector<8x8xi1>, vector<8x8xf32>
    %cst_34 = arith.constant dense<0xFF800000> : vector<8xf32>
    %85 = vector.multi_reduction <maximumf>, %84, %cst_34 [1] : vector<8x8xf32> to vector<8xf32>
    %86 = vector.shape_cast %85 : vector<8xf32> to vector<8x1xf32>
    %87 = vector.broadcast %86 : vector<8x1xf32> to vector<8x8xf32>
    %88 = arith.subf %84, %87 : vector<8x8xf32>
    %89 = math.exp %88 : vector<8x8xf32>
    %cst_35 = arith.constant dense<0.000000e+00> : vector<8xf32>
    %90 = vector.multi_reduction <add>, %89, %cst_35 [1] : vector<8x8xf32> to vector<8xf32>
    %91 = vector.shape_cast %90 : vector<8xf32> to vector<8x1xf32>
    %92 = tpu.reciprocal %91 {approx = true} : vector<8x1xf32> -> vector<8x1xf32>
    %93 = vector.broadcast %92 : vector<8x1xf32> to vector<8x8xf32>
    %94 = arith.mulf %89, %93 : vector<8x8xf32>
    %95 = vector.extract_strided_slice %17 {offsets = [0, 16], sizes = [8, 8], strides = [1, 1]} : vector<8x32xf32> to vector<8x8xf32>
    %96 = arith.truncf %94 : vector<8x8xf32> to vector<8x8xbf16>
    %97 = arith.truncf %95 : vector<8x8xf32> to vector<8x8xbf16>
    %cst_36 = arith.constant dense<0.000000e+00> : vector<8x8xf32>
    %98 = tpu.matmul %96, %97, %cst_36 {dimension_numbers = #tpu.dot_dimension_numbers<[1], [0], [0], [1], [0, 0, 1, 1], [], []>} : vector<8x8xbf16>, vector<8x8xbf16>, vector<8x8xf32> -> vector<8x8xf32>
    %99 = vector.extract_strided_slice %18 {offsets = [16, 0], sizes = [8, 32], strides = [1, 1]} : vector<32x32xf32> to vector<8x32xf32>
    %100 = arith.truncf %98 : vector<8x8xf32> to vector<8x8xbf16>
    %101 = arith.truncf %99 : vector<8x32xf32> to vector<8x32xbf16>
    %cst_37 = arith.constant dense<0.000000e+00> : vector<8x32xf32>
    %102 = tpu.matmul %100, %101, %cst_37 {dimension_numbers = #tpu.dot_dimension_numbers<[1], [0], [0], [1], [0, 0, 1, 1], [], []>} : vector<8x8xbf16>, vector<8x32xbf16>, vector<8x32xf32> -> vector<8x32xf32>
    %103 = arith.addf %75, %102 : vector<8x32xf32>
    %104 = vector.extract_strided_slice %11 {offsets = [0, 24], sizes = [8, 8], strides = [1, 1]} : vector<8x32xf32> to vector<8x8xf32>
    %105 = vector.extract_strided_slice %16 {offsets = [0, 24], sizes = [8, 8], strides = [1, 1]} : vector<8x32xf32> to vector<8x8xf32>
    %106 = arith.truncf %104 : vector<8x8xf32> to vector<8x8xbf16>
    %107 = arith.truncf %105 : vector<8x8xf32> to vector<8x8xbf16>
    %cst_38 = arith.constant dense<0.000000e+00> : vector<8x8xf32>
    %108 = tpu.matmul %106, %107, %cst_38 {dimension_numbers = #tpu.dot_dimension_numbers<[1], [1], [0], [0], [0, 0, 1, 0], [], []>} : vector<8x8xbf16>, vector<8x8xbf16>, vector<8x8xf32> -> vector<8x8xf32>
    %cst_39 = arith.constant 0.000000e+00 : f32
    %109 = vector.broadcast %cst_39 : f32 to vector<8x8xf32>
    %110 = arith.cmpf oeq, %5, %109 : vector<8x8xf32>
    %cst_40 = arith.constant -1.000000e+20 : f32
    %111 = vector.broadcast %cst_40 : f32 to vector<8x8xf32>
    %112 = arith.select %110, %111, %108 : vector<8x8xi1>, vector<8x8xf32>
    %cst_41 = arith.constant dense<0xFF800000> : vector<8xf32>
    %113 = vector.multi_reduction <maximumf>, %112, %cst_41 [1] : vector<8x8xf32> to vector<8xf32>
    %114 = vector.shape_cast %113 : vector<8xf32> to vector<8x1xf32>
    %115 = vector.broadcast %114 : vector<8x1xf32> to vector<8x8xf32>
    %116 = arith.subf %112, %115 : vector<8x8xf32>
    %117 = math.exp %116 : vector<8x8xf32>
    %cst_42 = arith.constant dense<0.000000e+00> : vector<8xf32>
    %118 = vector.multi_reduction <add>, %117, %cst_42 [1] : vector<8x8xf32> to vector<8xf32>
    %119 = vector.shape_cast %118 : vector<8xf32> to vector<8x1xf32>
    %120 = tpu.reciprocal %119 {approx = true} : vector<8x1xf32> -> vector<8x1xf32>
    %121 = vector.broadcast %120 : vector<8x1xf32> to vector<8x8xf32>
    %122 = arith.mulf %117, %121 : vector<8x8xf32>
    %123 = vector.extract_strided_slice %17 {offsets = [0, 24], sizes = [8, 8], strides = [1, 1]} : vector<8x32xf32> to vector<8x8xf32>
    %124 = arith.truncf %122 : vector<8x8xf32> to vector<8x8xbf16>
    %125 = arith.truncf %123 : vector<8x8xf32> to vector<8x8xbf16>
    %cst_43 = arith.constant dense<0.000000e+00> : vector<8x8xf32>
    %126 = tpu.matmul %124, %125, %cst_43 {dimension_numbers = #tpu.dot_dimension_numbers<[1], [0], [0], [1], [0, 0, 1, 1], [], []>} : vector<8x8xbf16>, vector<8x8xbf16>, vector<8x8xf32> -> vector<8x8xf32>
    %127 = vector.extract_strided_slice %18 {offsets = [24, 0], sizes = [8, 32], strides = [1, 1]} : vector<32x32xf32> to vector<8x32xf32>
    %128 = arith.truncf %126 : vector<8x8xf32> to vector<8x8xbf16>
    %129 = arith.truncf %127 : vector<8x32xf32> to vector<8x32xbf16>
    %cst_44 = arith.constant dense<0.000000e+00> : vector<8x32xf32>
    %130 = tpu.matmul %128, %129, %cst_44 {dimension_numbers = #tpu.dot_dimension_numbers<[1], [0], [0], [1], [0, 0, 1, 1], [], []>} : vector<8x8xbf16>, vector<8x32xbf16>, vector<8x32xf32> -> vector<8x32xf32>
    %131 = arith.addf %103, %130 : vector<8x32xf32>
    %c0_45 = arith.constant 0 : index
    %c0_46 = arith.constant 0 : index
    %132 = vector.load %arg7[%c0_45, %c0_46] : memref<1x32xf32, #tpu.memory_space<vmem>>, vector<1x32xf32>
    %133 = vector.broadcast %132 : vector<1x32xf32> to vector<8x32xf32>
    %134 = arith.addf %131, %133 : vector<8x32xf32>
    %135 = arith.addf %134, %1 : vector<8x32xf32>
    %cst_47 = arith.constant dense<0.000000e+00> : vector<8xf32>
    %136 = vector.multi_reduction <add>, %135, %cst_47 [1] : vector<8x32xf32> to vector<8xf32>
    %137 = vector.shape_cast %136 : vector<8xf32> to vector<8x1xf32>
    %cst_48 = arith.constant 3.200000e+01 : f32
    %138 = vector.broadcast %cst_48 : f32 to vector<8x1xf32>
    %139 = arith.divf %137, %138 : vector<8x1xf32>
    %140 = vector.broadcast %139 : vector<8x1xf32> to vector<8x32xf32>
    %141 = arith.subf %135, %140 : vector<8x32xf32>
    %142 = arith.mulf %141, %141 : vector<8x32xf32>
    %cst_49 = arith.constant dense<0.000000e+00> : vector<8xf32>
    %143 = vector.multi_reduction <add>, %142, %cst_49 [1] : vector<8x32xf32> to vector<8xf32>
    %144 = vector.shape_cast %143 : vector<8xf32> to vector<8x1xf32>
    %cst_50 = arith.constant 3.200000e+01 : f32
    %145 = vector.broadcast %cst_50 : f32 to vector<8x1xf32>
    %146 = arith.divf %144, %145 : vector<8x1xf32>
    %147 = vector.broadcast %139 : vector<8x1xf32> to vector<8x32xf32>
    %148 = arith.subf %135, %147 : vector<8x32xf32>
    %cst_51 = arith.constant 9.99999974E-6 : f32
    %149 = vector.broadcast %cst_51 : f32 to vector<8x1xf32>
    %150 = arith.addf %146, %149 : vector<8x1xf32>
    %151 = math.rsqrt %150 : vector<8x1xf32>
    %152 = vector.broadcast %151 : vector<8x1xf32> to vector<8x32xf32>
    %153 = arith.mulf %148, %152 : vector<8x32xf32>
    %c0_52 = arith.constant 0 : index
    %c0_53 = arith.constant 0 : index
    %154 = vector.load %arg8[%c0_52, %c0_53] : memref<1x32xf32, #tpu.memory_space<vmem>>, vector<1x32xf32>
    %155 = vector.broadcast %154 : vector<1x32xf32> to vector<8x32xf32>
    %156 = arith.mulf %153, %155 : vector<8x32xf32>
    %c0_54 = arith.constant 0 : index
    %c0_55 = arith.constant 0 : index
    %157 = vector.load %arg9[%c0_54, %c0_55] : memref<1x32xf32, #tpu.memory_space<vmem>>, vector<1x32xf32>
    %158 = vector.broadcast %157 : vector<1x32xf32> to vector<8x32xf32>
    %159 = arith.addf %156, %158 : vector<8x32xf32>
    %c0_56 = arith.constant 0 : index
    %c0_57 = arith.constant 0 : index
    %c0_58 = arith.constant 0 : index
    %160 = vector.load %arg10[%c0_56, %c0_57, %c0_58] : memref<1x8x32xf32, #tpu.memory_space<vmem>>, vector<1x8x32xf32>
    %161 = vector.shape_cast %160 : vector<1x8x32xf32> to vector<8x32xf32>
    %162 = vector.shape_cast %159 : vector<8x32xf32> to vector<1x8x32xf32>
    tpu.vector_store %arg10[%c0_56, %c0_57, %c0_58], %162 {strides = array<i32>} : memref<1x8x32xf32, #tpu.memory_space<vmem>>, vector<1x8x32xf32>,
    return
  }
  func.func @transform_0(%arg0: i32) -> (i32, i32, i32) {
    %c0_i32 = arith.constant 0 : i32
    %c0_i32_0 = arith.constant 0 : i32
    %c0_i32_1 = arith.constant 0 : i32
    return %arg0, %c0_i32, %c0_i32_0 : i32, i32, i32
  }
  func.func @transform_1(%arg0: i32) -> (i32, i32, i32) {
    %c0_i32 = arith.constant 0 : i32
    %c0_i32_0 = arith.constant 0 : i32
    %c0_i32_1 = arith.constant 0 : i32
    return %arg0, %c0_i32, %c0_i32_0 : i32, i32, i32
  }
  func.func @transform_2(%arg0: i32) -> (i32, i32, i32) {
    %c0_i32 = arith.constant 0 : i32
    %c0_i32_0 = arith.constant 0 : i32
    %c0_i32_1 = arith.constant 0 : i32
    return %arg0, %c0_i32, %c0_i32_0 : i32, i32, i32
  }
  func.func @transform_3(%arg0: i32) -> (i32, i32) {
    %c0_i32 = arith.constant 0 : i32
    %c0_i32_0 = arith.constant 0 : i32
    %c0_i32_1 = arith.constant 0 : i32
    return %c0_i32, %c0_i32_0 : i32, i32
  }
  func.func @transform_4(%arg0: i32) -> (i32, i32) {
    %c0_i32 = arith.constant 0 : i32
    %c0_i32_0 = arith.constant 0 : i32
    %c0_i32_1 = arith.constant 0 : i32
    return %c0_i32, %c0_i32_0 : i32, i32
  }
  func.func @transform_5(%arg0: i32) -> (i32, i32) {
    %c0_i32 = arith.constant 0 : i32
    %c0_i32_0 = arith.constant 0 : i32
    %c0_i32_1 = arith.constant 0 : i32
    return %c0_i32, %c0_i32_0 : i32, i32
  }
  func.func @transform_6(%arg0: i32) -> (i32, i32) {
    %c0_i32 = arith.constant 0 : i32
    %c0_i32_0 = arith.constant 0 : i32
    %c0_i32_1 = arith.constant 0 : i32
    return %c0_i32, %c0_i32_0 : i32, i32
  }
  func.func @transform_7(%arg0: i32) -> (i32, i32) {
    %c0_i32 = arith.constant 0 : i32
    %c0_i32_0 = arith.constant 0 : i32
    %c0_i32_1 = arith.constant 0 : i32
    return %c0_i32, %c0_i32_0 : i32, i32
  }
  func.func @transform_8(%arg0: i32) -> (i32, i32) {
    %c0_i32 = arith.constant 0 : i32
    %c0_i32_0 = arith.constant 0 : i32
    %c0_i32_1 = arith.constant 0 : i32
    return %c0_i32, %c0_i32_0 : i32, i32
  }
  func.func @transform_9(%arg0: i32) -> (i32, i32, i32) {
    %c0_i32 = arith.constant 0 : i32
    %c0_i32_0 = arith.constant 0 : i32
    %c0_i32_1 = arith.constant 0 : i32
    return %arg0, %c0_i32, %c0_i32_0 : i32, i32, i32
  }
}

</mosaic_0001>

<llo_original>
// kernel: tpu_custom_call.1
$region0: #{tpu_custom_call.1}
  #allocation0 [shape = 'u32[]', space=smem, size = 0x4, offset = 0x4, fixed_abs, tag = 'smem constant byte address 0x4 - core index']
  #allocation1 [shape = 'u32[144,128]{1,0:T(1,128)}', space=vmem, size = 0x12000, scoped, tag = 'internal scratch']
  %s0 = inlined_call_operand.hbm [shape: f32[2,8,32], index: 0, kind: input, shape index: {}]
  %s1 = inlined_call_operand.hbm [shape: f32[2,8,32], index: 1, kind: input, shape index: {}]
  %s2 = inlined_call_operand.hbm [shape: f32[2,8,8], index: 2, kind: input, shape index: {}]
  %s3 = inlined_call_operand.hbm [shape: f32[32,32], index: 3, kind: input, shape index: {}]
  %s4 = inlined_call_operand.hbm [shape: f32[32,64], index: 4, kind: input, shape index: {}]
  %s5 = inlined_call_operand.hbm [shape: f32[32,32], index: 5, kind: input, shape index: {}]
  %s6 = inlined_call_operand.vmem [shape: f32[1,32], index: 6, kind: input, shape index: {}]
  %s7 = inlined_call_operand.vmem [shape: f32[1,32], index: 7, kind: input, shape index: {}]
  %s8 = inlined_call_operand.vmem [shape: f32[1,32], index: 8, kind: input, shape index: {}]
  %s9 = inlined_call_operand.hbm [shape: f32[2,8,32], index: 9, kind: output, shape index: {}]
  %s10 = sld [smem:[#allocation0]]
  $region93: #{tpu_custom_call.1} parent=0
    _
  %s12 = ssub.s32 1, %s10
  %s13 = scalar_select 0, %s12, %s10
  $region1: #{tpu_custom_call.1} parent=0
    #allocation2 [shape = 'u8[8192]{0}', space=vmem, size = 0x2000, scoped, tag = 'input window, operand 0']
    #allocation3 [shape = 's32[2]{0}', space=sflag, size = 0x8, scoped, tag = 'scoped memory for tpu_custom_call.1']
    #allocation4 [shape = 's32[2]{0}', space=sflag, size = 0x8, scoped, tag = 'scoped memory for tpu_custom_call.1']
    #allocation5 [shape = 'u8[8192]{0}', space=vmem, size = 0x2000, scoped, tag = 'input window, operand 1']
    #allocation6 [shape = 's32[2]{0}', space=sflag, size = 0x8, scoped, tag = 'scoped memory for tpu_custom_call.1']
    #allocation7 [shape = 'u8[8192]{0}', space=vmem, size = 0x2000, scoped, tag = 'input window, operand 2']
    #allocation8 [shape = 'u8[16384]{0}', space=vmem, size = 0x4000, scoped, tag = 'input window, operand 3, single buffered']
    #allocation9 [shape = 's32[1]{0}', space=sflag, size = 0x4, scoped, tag = 'scoped memory for tpu_custom_call.1']
    #allocation10 [shape = 'u8[16384]{0}', space=vmem, size = 0x4000, scoped, tag = 'input window, operand 4, single buffered']
    #allocation11 [shape = 'u8[16384]{0}', space=vmem, size = 0x4000, scoped, tag = 'input window, operand 5, single buffered']
    #allocation12 [shape = 's32[1]{0}', space=sflag, size = 0x4, scoped, tag = 'scoped memory for tpu_custom_call.1']
    #allocation13 [shape = 'u8[8192]{0}', space=vmem, size = 0x2000, scoped, tag = 'output window, operand 0']
    %14 = vsyncpa [#allocation3], 0
    %s15 = scalar_lea.sflag [#allocation3], 1
    %16 = vsyncpa %s15, 0
    %17 = vsyncpa [#allocation6], 0
    %s18 = scalar_lea.sflag [#allocation6], 1
    %19 = vsyncpa %s18, 0
    %20 = vsyncpa [#allocation9], 0
    %21 = vsyncpa [#allocation12], 0
    %22 = vsyncpa [#allocation4], 0
    %s23 = scalar_lea.sflag [#allocation4], 1
    %24 = vsyncpa %s23, 0
    loop: start=0, step=1, limit=4
    $region2: #{tpu_custom_call.1} parent=1 // loop_pre_header
      _
    $region3: #{tpu_custom_call.1} parent=1 // loop_header
      %s26 = sphi 0, %s30
      %p27 = scmp.ge.s32.totalorder %s26, 4
      %s36 = sphi 0, %s38
      %s39 = sphi 0, %s36
      %s40 = sphi 0, %s39
      %s56 = sphi 0, %s40
      %s62 = sphi 0, %s64
      %s65 = sphi 0, %s62
      %s66 = sphi 0, %s65
      %s82 = sphi 0, %s66
      %s88 = sphi 0, %s90
      %s91 = sphi 0, %s88
      %s92 = sphi 0, %s91
      %s108 = sphi 0, %s92
      %s112 = sphi 0, %s112
      %s114 = sphi 0, %s112
      %s115 = sphi 0, %s114
      %s129 = sphi 0, %s115
      %s133 = sphi 0, %s133
      %s135 = sphi 0, %s133
      %s136 = sphi 0, %s135
      %s150 = sphi 0, %s136
      %s154 = sphi 0, %s154
      %s156 = sphi 0, %s154
      %s157 = sphi 0, %s156
      %s171 = sphi 0, %s157
      %s175 = sphi 0, %s175
      %s177 = sphi 0, %s175
      %s178 = sphi 0, %s177
      %s192 = sphi 0, %s178
      %s196 = sphi 0, %s196
      %s198 = sphi 0, %s196
      %s199 = sphi 0, %s198
      %s213 = sphi 0, %s199
      %s217 = sphi 0, %s217
      %s219 = sphi 0, %s217
      %s220 = sphi 0, %s219
      %s234 = sphi 0, %s220
      %s240 = sphi 0, %s242
      %s243 = sphi 0, %s240
      %s244 = sphi 0, %s243
      %s260 = sphi 0, %s244
    $region4: #{tpu_custom_call.1} parent=1 // loop_header_branch
      %29 = sbr.rel (%p27) target = $region8
    $region5: #{tpu_custom_call.1} parent=1 // loop_body
      %s31 = ssub.s32 %s26, 1
      %s32 = ssub.s32 %s26, 2
      %s33 = sadd.s32 %s26, 1
      %s34 = ssub.s32 %s26, %s33
      %p35 = scmp.eq.s32.totalorder %s34, 0
      %s37 = sadd.s32 %s36, 1
      %s38 = scalar_select %p35, %s36, %s37
      %p41 = pneg %p35
      %p42 = scmp.eq.s32.totalorder %s26, 1
      %p43 = por %p41, %p42
      %p44 = scmp.ne.s32.totalorder %s36, %s39
      %p45 = scmp.eq.s32.totalorder %s26, 0
      %p46 = por %p44, %p45
      %p47 = scmp.ne.s32.totalorder %s36, %s39
      %p48 = scmp.eq.s32.totalorder %s31, 1
      %p49 = por %p47, %p48
      %p50 = scmp.ne.s32.totalorder %s39, %s40
      %p51 = scmp.eq.s32.totalorder %s31, 0
      %p52 = por %p50, %p51
      %p53 = scmp.ne.s32.totalorder %s39, %s40
      %p54 = scmp.eq.s32.totalorder %s32, 1
      %p55 = por %p53, %p54
      %p57 = scmp.ne.s32.totalorder %s40, %s56
      %p58 = scmp.eq.s32.totalorder %s32, 0
      %p59 = por %p57, %p58
      %s60 = ssub.s32 %s26, %s33
      %p61 = scmp.eq.s32.totalorder %s60, 0
      %s63 = sadd.s32 %s62, 1
      %s64 = scalar_select %p61, %s62, %s63
      %p67 = pneg %p61
      %p68 = scmp.eq.s32.totalorder %s26, 1
      %p69 = por %p67, %p68
      %p70 = scmp.ne.s32.totalorder %s62, %s65
      %p71 = scmp.eq.s32.totalorder %s26, 0
      %p72 = por %p70, %p71
      %p73 = scmp.ne.s32.totalorder %s62, %s65
      %p74 = scmp.eq.s32.totalorder %s31, 1
      %p75 = por %p73, %p74
      %p76 = scmp.ne.s32.totalorder %s65, %s66
      %p77 = scmp.eq.s32.totalorder %s31, 0
      %p78 = por %p76, %p77
      %p79 = scmp.ne.s32.totalorder %s65, %s66
      %p80 = scmp.eq.s32.totalorder %s32, 1
      %p81 = por %p79, %p80
      %p83 = scmp.ne.s32.totalorder %s66, %s82
      %p84 = scmp.eq.s32.totalorder %s32, 0
      %p85 = por %p83, %p84
      %s86 = ssub.s32 %s26, %s33
      %p87 = scmp.eq.s32.totalorder %s86, 0
      %s89 = sadd.s32 %s88, 1
      %s90 = scalar_select %p87, %s88, %s89
      %p93 = pneg %p87
      %p94 = scmp.eq.s32.totalorder %s26, 1
      %p95 = por %p93, %p94
      %p96 = scmp.ne.s32.totalorder %s88, %s91
      %p97 = scmp.eq.s32.totalorder %s26, 0
      %p98 = por %p96, %p97
      %p99 = scmp.ne.s32.totalorder %s88, %s91
      %p100 = scmp.eq.s32.totalorder %s31, 1
      %p101 = por %p99, %p100
      %p102 = scmp.ne.s32.totalorder %s91, %s92
      %p103 = scmp.eq.s32.totalorder %s31, 0
      %p104 = por %p102, %p103
      %p105 = scmp.ne.s32.totalorder %s91, %s92
      %p106 = scmp.eq.s32.totalorder %s32, 1
      %p107 = por %p105, %p106
      %p109 = scmp.ne.s32.totalorder %s92, %s108
      %p110 = scmp.eq.s32.totalorder %s32, 0
      %p111 = por %p109, %p110
      %s113 = sadd.s32 %s112, 1
      %p116 = scmp.eq.s32.totalorder %s26, 1
      %p117 = scmp.ne.s32.totalorder %s112, %s114
      %p118 = scmp.eq.s32.totalorder %s26, 0
      %p119 = por %p117, %p118
      %p120 = scmp.ne.s32.totalorder %s112, %s114
      %p121 = scmp.eq.s32.totalorder %s31, 1
      %p122 = por %p120, %p121
      %p123 = scmp.ne.s32.totalorder %s114, %s115
      %p124 = scmp.eq.s32.totalorder %s31, 0
      %p125 = por %p123, %p124
      %p126 = scmp.ne.s32.totalorder %s114, %s115
      %p127 = scmp.eq.s32.totalorder %s32, 1
      %p128 = por %p126, %p127
      %p130 = scmp.ne.s32.totalorder %s115, %s129
      %p131 = scmp.eq.s32.totalorder %s32, 0
      %p132 = por %p130, %p131
      %s134 = sadd.s32 %s133, 1
      %p137 = scmp.eq.s32.totalorder %s26, 1
      %p138 = scmp.ne.s32.totalorder %s133, %s135
      %p139 = scmp.eq.s32.totalorder %s26, 0
      %p140 = por %p138, %p139
      %p141 = scmp.ne.s32.totalorder %s133, %s135
      %p142 = scmp.eq.s32.totalorder %s31, 1
      %p143 = por %p141, %p142
      %p144 = scmp.ne.s32.totalorder %s135, %s136
      %p145 = scmp.eq.s32.totalorder %s31, 0
      %p146 = por %p144, %p145
      %p147 = scmp.ne.s32.totalorder %s135, %s136
      %p148 = scmp.eq.s32.totalorder %s32, 1
      %p149 = por %p147, %p148
      %p151 = scmp.ne.s32.totalorder %s136, %s150
      %p152 = scmp.eq.s32.totalorder %s32, 0
      %p153 = por %p151, %p152
      %s155 = sadd.s32 %s154, 1
      %p158 = scmp.eq.s32.totalorder %s26, 1
      %p159 = scmp.ne.s32.totalorder %s154, %s156
      %p160 = scmp.eq.s32.totalorder %s26, 0
      %p161 = por %p159, %p160
      %p162 = scmp.ne.s32.totalorder %s154, %s156
      %p163 = scmp.eq.s32.totalorder %s31, 1
      %p164 = por %p162, %p163
      %p165 = scmp.ne.s32.totalorder %s156, %s157
      %p166 = scmp.eq.s32.totalorder %s31, 0
      %p167 = por %p165, %p166
      %p168 = scmp.ne.s32.totalorder %s156, %s157
      %p169 = scmp.eq.s32.totalorder %s32, 1
      %p170 = por %p168, %p169
      %p172 = scmp.ne.s32.totalorder %s157, %s171
      %p173 = scmp.eq.s32.totalorder %s32, 0
      %p174 = por %p172, %p173
      %s176 = sadd.s32 %s175, 1
      %p179 = scmp.eq.s32.totalorder %s26, 1
      %p180 = scmp.ne.s32.totalorder %s175, %s177
      %p181 = scmp.eq.s32.totalorder %s26, 0
      %p182 = por %p180, %p181
      %p183 = scmp.ne.s32.totalorder %s175, %s177
      %p184 = scmp.eq.s32.totalorder %s31, 1
      %p185 = por %p183, %p184
      %p186 = scmp.ne.s32.totalorder %s177, %s178
      %p187 = scmp.eq.s32.totalorder %s31, 0
      %p188 = por %p186, %p187
      %p189 = scmp.ne.s32.totalorder %s177, %s178
      %p190 = scmp.eq.s32.totalorder %s32, 1
      %p191 = por %p189, %p190
      %p193 = scmp.ne.s32.totalorder %s178, %s192
      %p194 = scmp.eq.s32.totalorder %s32, 0
      %p195 = por %p193, %p194
      %s197 = sadd.s32 %s196, 1
      %p200 = scmp.eq.s32.totalorder %s26, 1
      %p201 = scmp.ne.s32.totalorder %s196, %s198
      %p202 = scmp.eq.s32.totalorder %s26, 0
      %p203 = por %p201, %p202
      %p204 = scmp.ne.s32.totalorder %s196, %s198
      %p205 = scmp.eq.s32.totalorder %s31, 1
      %p206 = por %p204, %p205
      %p207 = scmp.ne.s32.totalorder %s198, %s199
      %p208 = scmp.eq.s32.totalorder %s31, 0
      %p209 = por %p207, %p208
      %p210 = scmp.ne.s32.totalorder %s198, %s199
      %p211 = scmp.eq.s32.totalorder %s32, 1
      %p212 = por %p210, %p211
      %p214 = scmp.ne.s32.totalorder %s199, %s213
      %p215 = scmp.eq.s32.totalorder %s32, 0
      %p216 = por %p214, %p215
      %s218 = sadd.s32 %s217, 1
      %p221 = scmp.eq.s32.totalorder %s26, 1
      %p222 = scmp.ne.s32.totalorder %s217, %s219
      %p223 = scmp.eq.s32.totalorder %s26, 0
      %p224 = por %p222, %p223
      %p225 = scmp.ne.s32.totalorder %s217, %s219
      %p226 = scmp.eq.s32.totalorder %s31, 1
      %p227 = por %p225, %p226
      %p228 = scmp.ne.s32.totalorder %s219, %s220
      %p229 = scmp.eq.s32.totalorder %s31, 0
      %p230 = por %p228, %p229
      %p231 = scmp.ne.s32.totalorder %s219, %s220
      %p232 = scmp.eq.s32.totalorder %s32, 1
      %p233 = por %p231, %p232
      %p235 = scmp.ne.s32.totalorder %s220, %s234
      %p236 = scmp.eq.s32.totalorder %s32, 0
      %p237 = por %p235, %p236
      %s238 = ssub.s32 %s26, %s33
      %p239 = scmp.eq.s32.totalorder %s238, 0
      %s241 = sadd.s32 %s240, 1
      %s242 = scalar_select %p239, %s240, %s241
      %p245 = pneg %p239
      %p246 = scmp.eq.s32.totalorder %s26, 1
      %p247 = por %p245, %p246
      %p248 = scmp.ne.s32.totalorder %s240, %s243
      %p249 = scmp.eq.s32.totalorder %s26, 0
      %p250 = por %p248, %p249
      %p251 = scmp.ne.s32.totalorder %s240, %s243
      %p252 = scmp.eq.s32.totalorder %s31, 1
      %p253 = por %p251, %p252
      %p254 = scmp.ne.s32.totalorder %s243, %s244
      %p255 = scmp.eq.s32.totalorder %s31, 0
      %p256 = por %p254, %p255
      %p257 = scmp.ne.s32.totalorder %s243, %s244
      %p258 = scmp.eq.s32.totalorder %s32, 1
      %p259 = por %p257, %p258
      %p261 = scmp.ne.s32.totalorder %s244, %s260
      %p262 = scmp.eq.s32.totalorder %s32, 0
      %p263 = por %p261, %p262
      %p264 = scmp.le.s32.totalorder 1, %s26
      %p265 = scmp.lt.s32.totalorder %s26, 3
      %p266 = pnand %p264, %p265
      %p267 = pneg %p266
      // Predicated region
      $region9: #{tpu_custom_call.1} parent=5 // pred_check
        _
      $region10: #{tpu_custom_call.1} parent=5 // pred_check_branch
        %269 = sbr.rel (%p266) target = $region12
      $region11: #{tpu_custom_call.1} parent=5 // pred_region
        %s270 = ssub.s32 %s26, 1
        // Predicated region
        $region13: #{tpu_custom_call.1} parent=11 // pred_check
          %p271 = pneg %p125
        $region14: #{tpu_custom_call.1} parent=11 // pred_check_branch
          %273 = sbr.rel (%p271) target = $region16
        $region15: #{tpu_custom_call.1} parent=11 // pred_region
          %s275 = ssub.s32 512, 512
          %276 = vsyncadd [#allocation9], %s275
          %s277 = sshll.u32 [#allocation8], 4
          %s278 = int_to_ptr.vmem [resolvable:$true] %s277
          %283 = dma.hbm_to_vmem [thread:$0]  %s3, 512, %s278, [#allocation9], 128, 128, 8
        $region16: #{tpu_custom_call.1} parent=11 // pred_fallthru
          _
        // Predicated region
        $region17: #{tpu_custom_call.1} parent=11 // pred_check
          %p284 = pneg %p146
        $region18: #{tpu_custom_call.1} parent=11 // pred_check_branch
          %286 = sbr.rel (%p284) target = $region20
        $region19: #{tpu_custom_call.1} parent=11 // pred_region
          %s288 = ssub.s32 512, 512
          %289 = vsyncadd [#allocation9], %s288
          %s290 = sshll.u32 [#allocation10], 4
          %s291 = int_to_ptr.vmem [resolvable:$true] %s290
          %296 = dma.hbm_to_vmem [thread:$0]  %s4, 512, %s291, [#allocation9], 128, 128, 8
        $region20: #{tpu_custom_call.1} parent=11 // pred_fallthru
          _
        // Predicated region
        $region21: #{tpu_custom_call.1} parent=11 // pred_check
          %p297 = pneg %p167
        $region22: #{tpu_custom_call.1} parent=11 // pred_check_branch
          %299 = sbr.rel (%p297) target = $region24
        $region23: #{tpu_custom_call.1} parent=11 // pred_region
          %s301 = ssub.s32 512, 512
          %302 = vsyncadd [#allocation12], %s301
          %s303 = sshll.u32 [#allocation11], 4
          %s304 = int_to_ptr.vmem [resolvable:$true] %s303
          %309 = dma.hbm_to_vmem [thread:$0]  %s5, 512, %s304, [#allocation12], 128, 128, 8
        $region24: #{tpu_custom_call.1} parent=11 // pred_fallthru
          _
        // Predicated region
        $region25: #{tpu_custom_call.1} parent=11 // pred_check
          %p310 = pneg %p188
        $region26: #{tpu_custom_call.1} parent=11 // pred_check_branch
          %312 = sbr.rel (%p310) target = $region28
        $region27: #{tpu_custom_call.1} parent=11 // pred_region
          _
        $region28: #{tpu_custom_call.1} parent=11 // pred_fallthru
          _
        // Predicated region
        $region29: #{tpu_custom_call.1} parent=11 // pred_check
          %p313 = pneg %p209
        $region30: #{tpu_custom_call.1} parent=11 // pred_check_branch
          %315 = sbr.rel (%p313) target = $region32
        $region31: #{tpu_custom_call.1} parent=11 // pred_region
          _
        $region32: #{tpu_custom_call.1} parent=11 // pred_fallthru
          _
        // Predicated region
        $region33: #{tpu_custom_call.1} parent=11 // pred_check
          %p316 = pneg %p230
        $region34: #{tpu_custom_call.1} parent=11 // pred_check_branch
          %318 = sbr.rel (%p316) target = $region36
        $region35: #{tpu_custom_call.1} parent=11 // pred_region
          _
        $region36: #{tpu_custom_call.1} parent=11 // pred_fallthru
          _
      $region12: #{tpu_custom_call.1} parent=5 // pred_fallthru
        _
      %p319 = scmp.lt.s32.totalorder %s26, 2
      // Predicated region
      $region37: #{tpu_custom_call.1} parent=5 // pred_check
        %p320 = pneg %p319
      $region38: #{tpu_custom_call.1} parent=5 // pred_check_branch
        %322 = sbr.rel (%p320) target = $region40
      $region39: #{tpu_custom_call.1} parent=5 // pred_region
        // Predicated region
        $region41: #{tpu_custom_call.1} parent=39 // pred_check
          %p323 = pneg %p46
        $region42: #{tpu_custom_call.1} parent=39 // pred_check_branch
          %325 = sbr.rel (%p323) target = $region44
        $region43: #{tpu_custom_call.1} parent=39 // pred_region
          %s326 = sand.u32 %s36, 1
          %s327 = scalar_lea.sflag [#allocation3], %s326
          %s328 = sand.u32 %s36, 1
          %s329 = smul.addr %s328, 8
          %s330 = scalar_lea.vmem [#allocation2], %s329
          %s332 = ssub.s32 128, 128
          %333 = vsyncadd %s327, %s332
          %s334 = smul.addr %s26, 128
          %s335 = scalar_lea.hbm %s0, %s334
          %s337 = sshll.u32 %s330, 4
          %s338 = int_to_ptr.vmem [resolvable:$true] %s337
          %340 = dma.hbm_to_vmem [thread:$0]  %s335, 128, %s338, %s327
        $region44: #{tpu_custom_call.1} parent=39 // pred_fallthru
          _
        // Predicated region
        $region45: #{tpu_custom_call.1} parent=39 // pred_check
          %p341 = pneg %p72
        $region46: #{tpu_custom_call.1} parent=39 // pred_check_branch
          %343 = sbr.rel (%p341) target = $region48
        $region47: #{tpu_custom_call.1} parent=39 // pred_region
          %s344 = sand.u32 %s26, 1
          %s345 = scalar_lea.sflag [#allocation6], %s344
          %s346 = sand.u32 %s62, 1
          %s347 = smul.addr %s346, 8
          %s348 = scalar_lea.vmem [#allocation5], %s347
          %s350 = ssub.s32 128, 128
          %351 = vsyncadd %s345, %s350
          %s352 = smul.addr %s26, 128
          %s353 = scalar_lea.hbm %s1, %s352
          %s355 = sshll.u32 %s348, 4
          %s356 = int_to_ptr.vmem [resolvable:$true] %s355
          %358 = dma.hbm_to_vmem [thread:$0]  %s353, 128, %s356, %s345
        $region48: #{tpu_custom_call.1} parent=39 // pred_fallthru
          _
        // Predicated region
        $region49: #{tpu_custom_call.1} parent=39 // pred_check
          %p359 = pneg %p98
        $region50: #{tpu_custom_call.1} parent=39 // pred_check_branch
          %361 = sbr.rel (%p359) target = $region52
        $region51: #{tpu_custom_call.1} parent=39 // pred_region
          %s362 = sand.u32 %s26, 1
          %s363 = scalar_lea.sflag [#allocation6], %s362
          %s364 = sand.u32 %s88, 1
          %s365 = smul.addr %s364, 8
          %s366 = scalar_lea.vmem [#allocation7], %s365
          %s368 = ssub.s32 128, 128
          %369 = vsyncadd %s363, %s368
          %s370 = smul.addr %s26, 128
          %s371 = scalar_lea.hbm %s2, %s370
          %s373 = sshll.u32 %s366, 4
          %s374 = int_to_ptr.vmem [resolvable:$true] %s373
          %376 = dma.hbm_to_vmem [thread:$0]  %s371, 128, %s374, %s363
        $region52: #{tpu_custom_call.1} parent=39 // pred_fallthru
          _
      $region40: #{tpu_custom_call.1} parent=5 // pred_fallthru
        _
      %p377 = scmp.le.s32.totalorder 1, %s26
      %p378 = scmp.lt.s32.totalorder %s26, 3
      %p379 = pnand %p377, %p378
      %p380 = pneg %p379
      // Predicated region
      $region53: #{tpu_custom_call.1} parent=5 // pred_check
        _
      $region54: #{tpu_custom_call.1} parent=5 // pred_check_branch
        %382 = sbr.rel (%p379) target = $region56
      $region55: #{tpu_custom_call.1} parent=5 // pred_region
        %s383 = ssub.s32 %s26, 1
        %s384 = sand.u32 %s39, 1
        %s385 = scalar_lea.sflag [#allocation3], %s384
        %s386 = sand.u32 %s39, 1
        %s387 = smul.addr %s386, 8
        %s388 = scalar_lea.vmem [#allocation2], %s387
        // Predicated region
        $region57: #{tpu_custom_call.1} parent=55 // pred_check
          %p389 = pneg %p52
        $region58: #{tpu_custom_call.1} parent=55 // pred_check_branch
          %391 = sbr.rel (%p389) target = $region60
        $region59: #{tpu_custom_call.1} parent=55 // pred_region
          %392 = dma.done %s385, 128
        $region60: #{tpu_custom_call.1} parent=55 // pred_fallthru
          _
        %s393 = sand.u32 %s31, 1
        %s394 = scalar_lea.sflag [#allocation6], %s393
        %s395 = sand.u32 %s65, 1
        %s396 = smul.addr %s395, 8
        %s397 = scalar_lea.vmem [#allocation5], %s396
        // Predicated region
        $region61: #{tpu_custom_call.1} parent=55 // pred_check
          %p398 = pneg %p78
        $region62: #{tpu_custom_call.1} parent=55 // pred_check_branch
          %400 = sbr.rel (%p398) target = $region64
        $region63: #{tpu_custom_call.1} parent=55 // pred_region
          %401 = dma.done %s394, 128
        $region64: #{tpu_custom_call.1} parent=55 // pred_fallthru
          _
        %s402 = sand.u32 %s31, 1
        %s403 = scalar_lea.sflag [#allocation6], %s402
        %s404 = sand.u32 %s91, 1
        %s405 = smul.addr %s404, 8
        %s406 = scalar_lea.vmem [#allocation7], %s405
        // Predicated region
        $region65: #{tpu_custom_call.1} parent=55 // pred_check
          %p407 = pneg %p104
        $region66: #{tpu_custom_call.1} parent=55 // pred_check_branch
          %409 = sbr.rel (%p407) target = $region68
        $region67: #{tpu_custom_call.1} parent=55 // pred_region
          %410 = dma.done %s403, 128
        $region68: #{tpu_custom_call.1} parent=55 // pred_fallthru
          _
        // Predicated region
        $region69: #{tpu_custom_call.1} parent=55 // pred_check
          %p411 = pneg %p125
        $region70: #{tpu_custom_call.1} parent=55 // pred_check_branch
          %413 = sbr.rel (%p411) target = $region72
        $region71: #{tpu_custom_call.1} parent=55 // pred_region
          %414 = dma.done [#allocation9], 512
        $region72: #{tpu_custom_call.1} parent=55 // pred_fallthru
          _
        // Predicated region
        $region73: #{tpu_custom_call.1} parent=55 // pred_check
          %p415 = pneg %p146
        $region74: #{tpu_custom_call.1} parent=55 // pred_check_branch
          %417 = sbr.rel (%p415) target = $region76
        $region75: #{tpu_custom_call.1} parent=55 // pred_region
          %418 = dma.done [#allocation9], 512
        $region76: #{tpu_custom_call.1} parent=55 // pred_fallthru
          _
        // Predicated region
        $region77: #{tpu_custom_call.1} parent=55 // pred_check
          %p419 = pneg %p167
        $region78: #{tpu_custom_call.1} parent=55 // pred_check_branch
          %421 = sbr.rel (%p419) target = $region80
        $region79: #{tpu_custom_call.1} parent=55 // pred_region
          %422 = dma.done [#allocation12], 512
        $region80: #{tpu_custom_call.1} parent=55 // pred_fallthru
          _
        %s423 = sand.u32 %s39, 1
        %s424 = scalar_lea.sflag [#allocation3], %s423
        %s425 = sand.u32 %s39, 1
        %s426 = smul.addr %s425, 8
        %s427 = scalar_lea.vmem [#allocation2], %s426
        %p428 = pneg %p52
        %p429 = pneg %p49
        %s430 = sand.u32 %s31, 1
        %s431 = scalar_lea.sflag [#allocation6], %s430
        %s432 = sand.u32 %s65, 1
        %s433 = smul.addr %s432, 8
        %s434 = scalar_lea.vmem [#allocation5], %s433
        %p435 = pneg %p78
        %p436 = pneg %p75
        %s437 = sand.u32 %s31, 1
        %s438 = scalar_lea.sflag [#allocation6], %s437
        %s439 = sand.u32 %s91, 1
        %s440 = smul.addr %s439, 8
        %s441 = scalar_lea.vmem [#allocation7], %s440
        %p442 = pneg %p104
        %p443 = pneg %p101
        %p444 = pneg %p125
        %p445 = pneg %p122
        %p446 = pneg %p146
        %p447 = pneg %p143
        %p448 = pneg %p167
        %p449 = pneg %p164
        %p450 = pneg %p188
        %p451 = pneg %p185
        %p452 = pneg %p209
        %p453 = pneg %p206
        %p454 = pneg %p230
        %p455 = pneg %p227
        %p456 = pneg %p256
        %p457 = pneg %p253
        %s458 = sand.u32 %s243, 1
        %s459 = scalar_lea.sflag [#allocation4], %s458
        %s460 = sand.u32 %s243, 1
        %s461 = smul.addr %s460, 8
        %s462 = scalar_lea.vmem [#allocation13], %s461
        %v464 = vld [vmem:[%s388] sm:$0xff]
        %v465 = vld [vmem:[%s397] sm:$0xff]
        %v466 = vld [vmem:[%s406] sm:$0xff]
        %v467 = vld [vmem:[#allocation8] sm:$0xff]
        %v468 = vld [vmem:[#allocation8 + $0x8] sm:$0xff]
        %v469 = vld [vmem:[#allocation8 + $0x10] sm:$0xff]
        %v470 = vld [vmem:[#allocation8 + $0x18] sm:$0xff]
        %v471 = vpack.c.bf16 %v464, %v464
        %v472 = vpack.c.bf16 %v468, %v467
        %v473 = vpack.c.bf16 %v470, %v469
        %vm474 = vcmask 261120
        %v476 = vsel %vm474, %v471, 0
        %478 = vmatprep.subr.bf16.mxu0 0
        %479 = vmatpush1.bf16.msra.mxu0 %v472
        %480 = vmatprep.subr.bf16.mxu0 0
        %481 = vmatpush1.bf16.msra.mxu0 %v473
        %482 = vmatprep.subr.bf16.mxu0 0
        %483 = vmatpush1.bf16.msra.mxu0 0
        %484 = vmatprep.subr.bf16.mxu0 0
        %485 = vmatpush1.bf16.msra.mxu0 0
        %486 = vmatprep.subr.bf16.mxu0 0
        %487 = vmatpush1.bf16.msra.mxu0 0
        %488 = vmatprep.subr.bf16.mxu0 0
        %489 = vmatpush1.bf16.msra.mxu0 0
        %490 = vmatprep.subr.bf16.mxu0 0
        %491 = vmatpush1.bf16.msra.mxu0 0
        %492 = vmatprep.subr.bf16.mxu0 0
        %493 = vmatpush1.bf16.msra.mxu0 0
        %494 = vmatprep.subr.bf16.mxu0 0
        %495 = vmatpush1.bf16.msra.mxu0 0
        %496 = vmatprep.subr.bf16.mxu0 0
        %497 = vmatpush1.bf16.msra.mxu0 0
        %498 = vmatprep.subr.bf16.mxu0 0
        %499 = vmatpush1.bf16.msra.mxu0 0
        %500 = vmatprep.subr.bf16.mxu0 0
        %501 = vmatpush1.bf16.msra.mxu0 0
        %502 = vmatprep.subr.bf16.mxu0 0
        %503 = vmatpush1.bf16.msra.mxu0 0
        %504 = vmatprep.subr.bf16.mxu0 0
        %505 = vmatpush1.bf16.msra.mxu0 0
        %506 = vmatprep.subr.bf16.mxu0 0
        %507 = vmatpush1.bf16.msra.mxu0 0
        %508 = vmatprep.subr.bf16.mxu0 0
        %509 = vmatpush1.bf16.msra.mxu0 0
        %510 = vmatprep.mubr.bf16.mxu0 0
        %511 = vmatmul.mubr.bf16.gmra.mrb[0].mxu0 %v476
        %v512 = vpop.f32.mrb[0].mxu0
        %v513 = vadd.f32 0.0, %v512
        %v514 = vpop.f32.mrb[0].mxu0
        %v515 = vpop.f32.mrb[0].mxu0
        %v516 = vpop.f32.mrb[0].mxu0
        %517 = vdwg.mxu0
        %v518 = vmul.f32 %v513, 0.17677669
        %v519 = vld [vmem:[#allocation10] sm:$0xff]
        %v520 = vld [vmem:[#allocation10 + $0x8] sm:$0xff]
        %v521 = vld [vmem:[#allocation10 + $0x10] sm:$0xff]
        %v522 = vld [vmem:[#allocation10 + $0x18] sm:$0xff]
        %v523 = vpack.c.bf16 %v465, %v465
        %v524 = vpack.c.bf16 %v520, %v519
        %v525 = vpack.c.bf16 %v522, %v521
        %v527 = vsel %vm474, %v523, 0
        %529 = vmatprep.subr.bf16.mxu0 0
        %530 = vmatpush1.bf16.msra.mxu0 %v524
        %531 = vmatprep.subr.bf16.mxu0 0
        %532 = vmatpush1.bf16.msra.mxu0 %v525
        %533 = vmatprep.subr.bf16.mxu0 0
        %534 = vmatpush1.bf16.msra.mxu0 0
        %535 = vmatprep.subr.bf16.mxu0 0
        %536 = vmatpush1.bf16.msra.mxu0 0
        %537 = vmatprep.subr.bf16.mxu0 0
        %538 = vmatpush1.bf16.msra.mxu0 0
        %539 = vmatprep.subr.bf16.mxu0 0
        %540 = vmatpush1.bf16.msra.mxu0 0
        %541 = vmatprep.subr.bf16.mxu0 0
        %542 = vmatpush1.bf16.msra.mxu0 0
        %543 = vmatprep.subr.bf16.mxu0 0
        %544 = vmatpush1.bf16.msra.mxu0 0
        %545 = vmatprep.subr.bf16.mxu0 0
        %546 = vmatpush1.bf16.msra.mxu0 0
        %547 = vmatprep.subr.bf16.mxu0 0
        %548 = vmatpush1.bf16.msra.mxu0 0
        %549 = vmatprep.subr.bf16.mxu0 0
        %550 = vmatpush1.bf16.msra.mxu0 0
        %551 = vmatprep.subr.bf16.mxu0 0
        %552 = vmatpush1.bf16.msra.mxu0 0
        %553 = vmatprep.subr.bf16.mxu0 0
        %554 = vmatpush1.bf16.msra.mxu0 0
        %555 = vmatprep.subr.bf16.mxu0 0
        %556 = vmatpush1.bf16.msra.mxu0 0
        %557 = vmatprep.subr.bf16.mxu0 0
        %558 = vmatpush1.bf16.msra.mxu0 0
        %559 = vmatprep.subr.bf16.mxu0 0
        %560 = vmatpush1.bf16.msra.mxu0 0
        %561 = vmatprep.mubr.bf16.mxu0 0
        %562 = vmatmul.mubr.bf16.gmra.mrb[0].mxu0 %v527
        %v563 = vpop.f32.mrb[0].mxu0
        %v564 = vadd.f32 0.0, %v563
        %v565 = vpop.f32.mrb[0].mxu0
        %v566 = vpop.f32.mrb[0].mxu0
        %v567 = vpop.f32.mrb[0].mxu0
        %568 = vdwg.mxu0
        %v569 = vld [vmem:[#allocation11] sm:$0xff]
        %v570 = vld [vmem:[#allocation11 + $0x8] sm:$0xff]
        %v571 = vld [vmem:[#allocation11 + $0x10] sm:$0xff]
        %v572 = vld [vmem:[#allocation11 + $0x18] sm:$0xff]
        %v573 = vpack.c.bf16 %v518, %v518
        %v574 = vpack.c.bf16 %v564, %v564
        %vm575 = vcmask 64512
        %v577 = vsel %vm575, %v573, 0
        %v580 = vsel %vm575, %v574, 0
        %582 = vmatprep.subr.bf16.mxu0 0
        %583 = vmatpush1.bf16.xpose.msra.mxu0 %v580
        %584 = vmatprep.subr.bf16.mxu0 0
        %585 = vmatpush1.bf16.xpose.msra.mxu0 0
        %586 = vmatprep.subr.bf16.mxu0 0
        %587 = vmatpush1.bf16.xpose.msra.mxu0 0
        %588 = vmatprep.subr.bf16.mxu0 0
        %589 = vmatpush1.bf16.xpose.msra.mxu0 0
        %590 = vmatprep.subr.bf16.mxu0 0
        %591 = vmatpush1.bf16.xpose.msra.mxu0 0
        %592 = vmatprep.subr.bf16.mxu0 0
        %593 = vmatpush1.bf16.xpose.msra.mxu0 0
        %594 = vmatprep.subr.bf16.mxu0 0
        %595 = vmatpush1.bf16.xpose.msra.mxu0 0
        %596 = vmatprep.subr.bf16.mxu0 0
        %597 = vmatpush1.bf16.xpose.msra.mxu0 0
        %598 = vmatprep.subr.bf16.mxu0 0
        %599 = vmatpush1.bf16.xpose.msra.mxu0 0
        %600 = vmatprep.subr.bf16.mxu0 0
        %601 = vmatpush1.bf16.xpose.msra.mxu0 0
        %602 = vmatprep.subr.bf16.mxu0 0
        %603 = vmatpush1.bf16.xpose.msra.mxu0 0
        %604 = vmatprep.subr.bf16.mxu0 0
        %605 = vmatpush1.bf16.xpose.msra.mxu0 0
        %606 = vmatprep.subr.bf16.mxu0 0
        %607 = vmatpush1.bf16.xpose.msra.mxu0 0
        %608 = vmatprep.subr.bf16.mxu0 0
        %609 = vmatpush1.bf16.xpose.msra.mxu0 0
        %610 = vmatprep.subr.bf16.mxu0 0
        %611 = vmatpush1.bf16.xpose.msra.mxu0 0
        %612 = vmatprep.subr.bf16.mxu0 0
        %613 = vmatpush1.bf16.xpose.msra.mxu0 0
        %614 = vmatprep.mubr.bf16.mxu0 0
        %615 = vmatmul.mubr.bf16.gmra.mrb[0].mxu0 %v577
        %v616 = vpop.f32.mrb[0].mxu0
        %v617 = vadd.f32 0.0, %v616
        %v618 = vpop.f32.mrb[0].mxu0
        %v619 = vpop.f32.mrb[0].mxu0
        %v620 = vpop.f32.mrb[0].mxu0
        %621 = vdwg.mxu0
        %vm622 = vcmp.eq.f32.partialorder %v466, 0.0
        %v623 = vsel %vm622, -1e+20, %v617
        %v624 = vsel %vm575, %v623, -inf
        %625 = vmax.xlane.f32.xlu0 %v624
        %v626 = vpop.xlane.xlu0 %625
        %v627 = vsub.f32 %v623, %v626
        %v628 = vmul.f32 %v627, 1.442695
        %v629 = vpow.pop %v628
        %v630 = vsel %vm575, %v629, 0.0
        %631 = vadd.xlane.f32.xlu0 %v630
        %v632 = vpop.xlane.xlu0 %631
        %v633 = vrcp.pop %v632
        %v634 = vmul.f32 %v629, %v633
        %v635 = vpack.c.bf16 %v634, %v634
        %637 = vrot.lane.b32.xlu0 %v574, 96
        %v638 = vpop.permute.xlu0 %637
        %v640 = vsel %vm575, %v635, 0
        %vm642 = vcmask 1043456
        %v644 = vsel %vm642, %v638, 0
        %646 = vmatprep.subr.bf16.mxu0 0
        %647 = vmatpush1.bf16.msra.mxu0 %v644
        %648 = vmatprep.subr.bf16.mxu0 0
        %649 = vmatpush1.bf16.msra.mxu0 0
        %650 = vmatprep.subr.bf16.mxu0 0
        %651 = vmatpush1.bf16.msra.mxu0 0
        %652 = vmatprep.subr.bf16.mxu0 0
        %653 = vmatpush1.bf16.msra.mxu0 0
        %654 = vmatprep.subr.bf16.mxu0 0
        %655 = vmatpush1.bf16.msra.mxu0 0
        %656 = vmatprep.subr.bf16.mxu0 0
        %657 = vmatpush1.bf16.msra.mxu0 0
        %658 = vmatprep.subr.bf16.mxu0 0
        %659 = vmatpush1.bf16.msra.mxu0 0
        %660 = vmatprep.subr.bf16.mxu0 0
        %661 = vmatpush1.bf16.msra.mxu0 0
        %662 = vmatprep.subr.bf16.mxu0 0
        %663 = vmatpush1.bf16.msra.mxu0 0
        %664 = vmatprep.subr.bf16.mxu0 0
        %665 = vmatpush1.bf16.msra.mxu0 0
        %666 = vmatprep.subr.bf16.mxu0 0
        %667 = vmatpush1.bf16.msra.mxu0 0
        %668 = vmatprep.subr.bf16.mxu0 0
        %669 = vmatpush1.bf16.msra.mxu0 0
        %670 = vmatprep.subr.bf16.mxu0 0
        %671 = vmatpush1.bf16.msra.mxu0 0
        %672 = vmatprep.subr.bf16.mxu0 0
        %673 = vmatpush1.bf16.msra.mxu0 0
        %674 = vmatprep.subr.bf16.mxu0 0
        %675 = vmatpush1.bf16.msra.mxu0 0
        %676 = vmatprep.subr.bf16.mxu0 0
        %677 = vmatpush1.bf16.msra.mxu0 0
        %678 = vmatprep.mubr.bf16.mxu0 0
        %679 = vmatmul.mubr.bf16.gmra.mrb[0].mxu0 %v640
        %v680 = vpop.f32.mrb[0].mxu0
        %v681 = vadd.f32 0.0, %v680
        %v682 = vpop.f32.mrb[0].mxu0
        %v683 = vpop.f32.mrb[0].mxu0
        %v684 = vpop.f32.mrb[0].mxu0
        %685 = vdwg.mxu0
        %v686 = vpack.c.bf16 %v681, %v681
        %v687 = vpack.c.bf16 %v569, %v569
        %689 = vrot.lane.b32.xlu0 %v573, 120
        %v690 = vpop.permute.xlu0 %689
        %691 = vrot.lane.b32.xlu0 %v574, 120
        %v692 = vpop.permute.xlu0 %691
        %v694 = vsel %vm575, %v690, 0
        %v697 = vsel %vm575, %v692, 0
        %699 = vmatprep.subr.bf16.mxu0 0
        %700 = vmatpush1.bf16.xpose.msra.mxu0 %v697
        %701 = vmatprep.subr.bf16.mxu0 0
        %702 = vmatpush1.bf16.xpose.msra.mxu0 0
        %703 = vmatprep.subr.bf16.mxu0 0
        %704 = vmatpush1.bf16.xpose.msra.mxu0 0
        %705 = vmatprep.subr.bf16.mxu0 0
        %706 = vmatpush1.bf16.xpose.msra.mxu0 0
        %707 = vmatprep.subr.bf16.mxu0 0
        %708 = vmatpush1.bf16.xpose.msra.mxu0 0
        %709 = vmatprep.subr.bf16.mxu0 0
        %710 = vmatpush1.bf16.xpose.msra.mxu0 0
        %711 = vmatprep.subr.bf16.mxu0 0
        %712 = vmatpush1.bf16.xpose.msra.mxu0 0
        %713 = vmatprep.subr.bf16.mxu0 0
        %714 = vmatpush1.bf16.xpose.msra.mxu0 0
        %715 = vmatprep.subr.bf16.mxu0 0
        %716 = vmatpush1.bf16.xpose.msra.mxu0 0
        %717 = vmatprep.subr.bf16.mxu0 0
        %718 = vmatpush1.bf16.xpose.msra.mxu0 0
        %719 = vmatprep.subr.bf16.mxu0 0
        %720 = vmatpush1.bf16.xpose.msra.mxu0 0
        %721 = vmatprep.subr.bf16.mxu0 0
        %722 = vmatpush1.bf16.xpose.msra.mxu0 0
        %723 = vmatprep.subr.bf16.mxu0 0
        %724 = vmatpush1.bf16.xpose.msra.mxu0 0
        %725 = vmatprep.subr.bf16.mxu0 0
        %726 = vmatpush1.bf16.xpose.msra.mxu0 0
        %727 = vmatprep.subr.bf16.mxu0 0
        %728 = vmatpush1.bf16.xpose.msra.mxu0 0
        %729 = vmatprep.subr.bf16.mxu0 0
        %730 = vmatpush1.bf16.xpose.msra.mxu0 0
        %731 = vmatprep.mubr.bf16.mxu0 0
        %732 = vmatmul.mubr.bf16.gmra.mrb[0].mxu0 %v694
        %v733 = vpop.f32.mrb[0].mxu0
        %v734 = vadd.f32 0.0, %v733
        %v735 = vpop.f32.mrb[0].mxu0
        %v736 = vpop.f32.mrb[0].mxu0
        %v737 = vpop.f32.mrb[0].mxu0
        %738 = vdwg.mxu0
        %v739 = vsel %vm622, -1e+20, %v734
        %v740 = vsel %vm575, %v739, -inf
        %741 = vmax.xlane.f32.xlu0 %v740
        %v742 = vpop.xlane.xlu0 %741
        %v743 = vsub.f32 %v739, %v742
        %v744 = vmul.f32 %v743, 1.442695
        %v745 = vpow.pop %v744
        %v746 = vsel %vm575, %v745, 0.0
        %747 = vadd.xlane.f32.xlu0 %v746
        %v748 = vpop.xlane.xlu0 %747
        %v749 = vrcp.pop %v748
        %v750 = vmul.f32 %v745, %v749
        %v751 = vpack.c.bf16 %v750, %v750
        %752 = vrot.lane.b32.xlu0 %v574, 88
        %v753 = vpop.permute.xlu0 %752
        %v755 = vsel %vm575, %v751, 0
        %v758 = vsel %vm642, %v753, 0
        %760 = vmatprep.subr.bf16.mxu0 0
        %761 = vmatpush1.bf16.msra.mxu0 %v758
        %762 = vmatprep.subr.bf16.mxu0 0
        %763 = vmatpush1.bf16.msra.mxu0 0
        %764 = vmatprep.subr.bf16.mxu0 0
        %765 = vmatpush1.bf16.msra.mxu0 0
        %766 = vmatprep.subr.bf16.mxu0 0
        %767 = vmatpush1.bf16.msra.mxu0 0
        %768 = vmatprep.subr.bf16.mxu0 0
        %769 = vmatpush1.bf16.msra.mxu0 0
        %770 = vmatprep.subr.bf16.mxu0 0
        %771 = vmatpush1.bf16.msra.mxu0 0
        %772 = vmatprep.subr.bf16.mxu0 0
        %773 = vmatpush1.bf16.msra.mxu0 0
        %774 = vmatprep.subr.bf16.mxu0 0
        %775 = vmatpush1.bf16.msra.mxu0 0
        %776 = vmatprep.subr.bf16.mxu0 0
        %777 = vmatpush1.bf16.msra.mxu0 0
        %778 = vmatprep.subr.bf16.mxu0 0
        %779 = vmatpush1.bf16.msra.mxu0 0
        %780 = vmatprep.subr.bf16.mxu0 0
        %781 = vmatpush1.bf16.msra.mxu0 0
        %782 = vmatprep.subr.bf16.mxu0 0
        %783 = vmatpush1.bf16.msra.mxu0 0
        %784 = vmatprep.subr.bf16.mxu0 0
        %785 = vmatpush1.bf16.msra.mxu0 0
        %786 = vmatprep.subr.bf16.mxu0 0
        %787 = vmatpush1.bf16.msra.mxu0 0
        %788 = vmatprep.subr.bf16.mxu0 0
        %789 = vmatpush1.bf16.msra.mxu0 0
        %790 = vmatprep.subr.bf16.mxu0 0
        %791 = vmatpush1.bf16.msra.mxu0 0
        %792 = vmatprep.mubr.bf16.mxu0 0
        %793 = vmatmul.mubr.bf16.gmra.mrb[0].mxu0 %v755
        %v794 = vpop.f32.mrb[0].mxu0
        %v795 = vadd.f32 0.0, %v794
        %v796 = vpop.f32.mrb[0].mxu0
        %v797 = vpop.f32.mrb[0].mxu0
        %v798 = vpop.f32.mrb[0].mxu0
        %799 = vdwg.mxu0
        %v800 = vpack.c.bf16 %v795, %v795
        %v801 = vpack.c.bf16 %v570, %v570
        %v803 = vsel %vm575, %v800, 0
        %v806 = vsel %vm642, %v801, 0
        %808 = vmatprep.subr.bf16.mxu0 0
        %809 = vmatpush1.bf16.msra.mxu0 %v806
        %810 = vmatprep.subr.bf16.mxu0 0
        %811 = vmatpush1.bf16.msra.mxu0 0
        %812 = vmatprep.subr.bf16.mxu0 0
        %813 = vmatpush1.bf16.msra.mxu0 0
        %814 = vmatprep.subr.bf16.mxu0 0
        %815 = vmatpush1.bf16.msra.mxu0 0
        %816 = vmatprep.subr.bf16.mxu0 0
        %817 = vmatpush1.bf16.msra.mxu0 0
        %818 = vmatprep.subr.bf16.mxu0 0
        %819 = vmatpush1.bf16.msra.mxu0 0
        %820 = vmatprep.subr.bf16.mxu0 0
        %821 = vmatpush1.bf16.msra.mxu0 0
        %822 = vmatprep.subr.bf16.mxu0 0
        %823 = vmatpush1.bf16.msra.mxu0 0
        %824 = vmatprep.subr.bf16.mxu0 0
        %825 = vmatpush1.bf16.msra.mxu0 0
        %826 = vmatprep.subr.bf16.mxu0 0
        %827 = vmatpush1.bf16.msra.mxu0 0
        %828 = vmatprep.subr.bf16.mxu0 0
        %829 = vmatpush1.bf16.msra.mxu0 0
        %830 = vmatprep.subr.bf16.mxu0 0
        %831 = vmatpush1.bf16.msra.mxu0 0
        %832 = vmatprep.subr.bf16.mxu0 0
        %833 = vmatpush1.bf16.msra.mxu0 0
        %834 = vmatprep.subr.bf16.mxu0 0
        %835 = vmatpush1.bf16.msra.mxu0 0
        %836 = vmatprep.subr.bf16.mxu0 0
        %837 = vmatpush1.bf16.msra.mxu0 0
        %838 = vmatprep.subr.bf16.mxu0 0
        %839 = vmatpush1.bf16.msra.mxu0 0
        %840 = vmatprep.mubr.bf16.mxu0 0
        %841 = vmatmul.mubr.bf16.gmra.mrb[0].mxu0 %v803
        %v842 = vpop.f32.mrb[0].mxu0
        %v843 = vadd.f32 0.0, %v842
        %v844 = vpop.f32.mrb[0].mxu0
        %v845 = vpop.f32.mrb[0].mxu0
        %v846 = vpop.f32.mrb[0].mxu0
        %847 = vdwg.mxu0
        %v849 = vsel %vm575, %v686, 0
        %v852 = vsel %vm642, %v687, 0
        %854 = vmatprep.subr.bf16.mxu0 0
        %855 = vmatpush1.bf16.msra.mxu0 %v852
        %856 = vmatprep.subr.bf16.mxu0 0
        %857 = vmatpush1.bf16.msra.mxu0 0
        %858 = vmatprep.subr.bf16.mxu0 0
        %859 = vmatpush1.bf16.msra.mxu0 0
        %860 = vmatprep.subr.bf16.mxu0 0
        %861 = vmatpush1.bf16.msra.mxu0 0
        %862 = vmatprep.subr.bf16.mxu0 0
        %863 = vmatpush1.bf16.msra.mxu0 0
        %864 = vmatprep.subr.bf16.mxu0 0
        %865 = vmatpush1.bf16.msra.mxu0 0
        %866 = vmatprep.subr.bf16.mxu0 0
        %867 = vmatpush1.bf16.msra.mxu0 0
        %868 = vmatprep.subr.bf16.mxu0 0
        %869 = vmatpush1.bf16.msra.mxu0 0
        %870 = vmatprep.subr.bf16.mxu0 0
        %871 = vmatpush1.bf16.msra.mxu0 0
        %872 = vmatprep.subr.bf16.mxu0 0
        %873 = vmatpush1.bf16.msra.mxu0 0
        %874 = vmatprep.subr.bf16.mxu0 0
        %875 = vmatpush1.bf16.msra.mxu0 0
        %876 = vmatprep.subr.bf16.mxu0 0
        %877 = vmatpush1.bf16.msra.mxu0 0
        %878 = vmatprep.subr.bf16.mxu0 0
        %879 = vmatpush1.bf16.msra.mxu0 0
        %880 = vmatprep.subr.bf16.mxu0 0
        %881 = vmatpush1.bf16.msra.mxu0 0
        %882 = vmatprep.subr.bf16.mxu0 0
        %883 = vmatpush1.bf16.msra.mxu0 0
        %884 = vmatprep.subr.bf16.mxu0 0
        %885 = vmatpush1.bf16.msra.mxu0 0
        %886 = vmatprep.mubr.bf16.mxu0 0
        %887 = vmatmul.mubr.bf16.gmra.mrb[0].mxu0 %v849
        %v888 = vpop.f32.mrb[0].mxu0
        %v889 = vadd.f32 %v843, %v888
        %v890 = vpop.f32.mrb[0].mxu0
        %v891 = vpop.f32.mrb[0].mxu0
        %v892 = vpop.f32.mrb[0].mxu0
        %893 = vdwg.mxu0
        %894 = vrot.lane.b32.xlu0 %v573, 112
        %v895 = vpop.permute.xlu0 %894
        %896 = vrot.lane.b32.xlu0 %v574, 112
        %v897 = vpop.permute.xlu0 %896
        %v899 = vsel %vm575, %v895, 0
        %v902 = vsel %vm575, %v897, 0
        %904 = vmatprep.subr.bf16.mxu0 0
        %905 = vmatpush1.bf16.xpose.msra.mxu0 %v902
        %906 = vmatprep.subr.bf16.mxu0 0
        %907 = vmatpush1.bf16.xpose.msra.mxu0 0
        %908 = vmatprep.subr.bf16.mxu0 0
        %909 = vmatpush1.bf16.xpose.msra.mxu0 0
        %910 = vmatprep.subr.bf16.mxu0 0
        %911 = vmatpush1.bf16.xpose.msra.mxu0 0
        %912 = vmatprep.subr.bf16.mxu0 0
        %913 = vmatpush1.bf16.xpose.msra.mxu0 0
        %914 = vmatprep.subr.bf16.mxu0 0
        %915 = vmatpush1.bf16.xpose.msra.mxu0 0
        %916 = vmatprep.subr.bf16.mxu0 0
        %917 = vmatpush1.bf16.xpose.msra.mxu0 0
        %918 = vmatprep.subr.bf16.mxu0 0
        %919 = vmatpush1.bf16.xpose.msra.mxu0 0
        %920 = vmatprep.subr.bf16.mxu0 0
        %921 = vmatpush1.bf16.xpose.msra.mxu0 0
        %922 = vmatprep.subr.bf16.mxu0 0
        %923 = vmatpush1.bf16.xpose.msra.mxu0 0
        %924 = vmatprep.subr.bf16.mxu0 0
        %925 = vmatpush1.bf16.xpose.msra.mxu0 0
        %926 = vmatprep.subr.bf16.mxu0 0
        %927 = vmatpush1.bf16.xpose.msra.mxu0 0
        %928 = vmatprep.subr.bf16.mxu0 0
        %929 = vmatpush1.bf16.xpose.msra.mxu0 0
        %930 = vmatprep.subr.bf16.mxu0 0
        %931 = vmatpush1.bf16.xpose.msra.mxu0 0
        %932 = vmatprep.subr.bf16.mxu0 0
        %933 = vmatpush1.bf16.xpose.msra.mxu0 0
        %934 = vmatprep.subr.bf16.mxu0 0
        %935 = vmatpush1.bf16.xpose.msra.mxu0 0
        %936 = vmatprep.mubr.bf16.mxu0 0
        %937 = vmatmul.mubr.bf16.gmra.mrb[0].mxu0 %v899
        %v938 = vpop.f32.mrb[0].mxu0
        %v939 = vadd.f32 0.0, %v938
        %v940 = vpop.f32.mrb[0].mxu0
        %v941 = vpop.f32.mrb[0].mxu0
        %v942 = vpop.f32.mrb[0].mxu0
        %943 = vdwg.mxu0
        %v944 = vsel %vm622, -1e+20, %v939
        %v945 = vsel %vm575, %v944, -inf
        %946 = vmax.xlane.f32.xlu0 %v945
        %v947 = vpop.xlane.xlu0 %946
        %v948 = vsub.f32 %v944, %v947
        %v949 = vmul.f32 %v948, 1.442695
        %v950 = vpow.pop %v949
        %v951 = vsel %vm575, %v950, 0.0
        %952 = vadd.xlane.f32.xlu0 %v951
        %v953 = vpop.xlane.xlu0 %952
        %v954 = vrcp.pop %v953
        %v955 = vmul.f32 %v950, %v954
        %v956 = vpack.c.bf16 %v955, %v955
        %957 = vrot.lane.b32.xlu0 %v574, 80
        %v958 = vpop.permute.xlu0 %957
        %v960 = vsel %vm575, %v956, 0
        %v963 = vsel %vm642, %v958, 0
        %965 = vmatprep.subr.bf16.mxu0 0
        %966 = vmatpush1.bf16.msra.mxu0 %v963
        %967 = vmatprep.subr.bf16.mxu0 0
        %968 = vmatpush1.bf16.msra.mxu0 0
        %969 = vmatprep.subr.bf16.mxu0 0
        %970 = vmatpush1.bf16.msra.mxu0 0
        %971 = vmatprep.subr.bf16.mxu0 0
        %972 = vmatpush1.bf16.msra.mxu0 0
        %973 = vmatprep.subr.bf16.mxu0 0
        %974 = vmatpush1.bf16.msra.mxu0 0
        %975 = vmatprep.subr.bf16.mxu0 0
        %976 = vmatpush1.bf16.msra.mxu0 0
        %977 = vmatprep.subr.bf16.mxu0 0
        %978 = vmatpush1.bf16.msra.mxu0 0
        %979 = vmatprep.subr.bf16.mxu0 0
        %980 = vmatpush1.bf16.msra.mxu0 0
        %981 = vmatprep.subr.bf16.mxu0 0
        %982 = vmatpush1.bf16.msra.mxu0 0
        %983 = vmatprep.subr.bf16.mxu0 0
        %984 = vmatpush1.bf16.msra.mxu0 0
        %985 = vmatprep.subr.bf16.mxu0 0
        %986 = vmatpush1.bf16.msra.mxu0 0
        %987 = vmatprep.subr.bf16.mxu0 0
        %988 = vmatpush1.bf16.msra.mxu0 0
        %989 = vmatprep.subr.bf16.mxu0 0
        %990 = vmatpush1.bf16.msra.mxu0 0
        %991 = vmatprep.subr.bf16.mxu0 0
        %992 = vmatpush1.bf16.msra.mxu0 0
        %993 = vmatprep.subr.bf16.mxu0 0
        %994 = vmatpush1.bf16.msra.mxu0 0
        %995 = vmatprep.subr.bf16.mxu0 0
        %996 = vmatpush1.bf16.msra.mxu0 0
        %997 = vmatprep.mubr.bf16.mxu0 0
        %998 = vmatmul.mubr.bf16.gmra.mrb[0].mxu0 %v960
        %v999 = vpop.f32.mrb[0].mxu0
        %v1000 = vadd.f32 0.0, %v999
        %v1001 = vpop.f32.mrb[0].mxu0
        %v1002 = vpop.f32.mrb[0].mxu0
        %v1003 = vpop.f32.mrb[0].mxu0
        %1004 = vdwg.mxu0
        %v1005 = vpack.c.bf16 %v1000, %v1000
        %v1006 = vpack.c.bf16 %v571, %v571
        %v1008 = vsel %vm575, %v1005, 0
        %v1011 = vsel %vm642, %v1006, 0
        %1013 = vmatprep.subr.bf16.mxu0 0
        %1014 = vmatpush1.bf16.msra.mxu0 %v1011
        %1015 = vmatprep.subr.bf16.mxu0 0
        %1016 = vmatpush1.bf16.msra.mxu0 0
        %1017 = vmatprep.subr.bf16.mxu0 0
        %1018 = vmatpush1.bf16.msra.mxu0 0
        %1019 = vmatprep.subr.bf16.mxu0 0
        %1020 = vmatpush1.bf16.msra.mxu0 0
        %1021 = vmatprep.subr.bf16.mxu0 0
        %1022 = vmatpush1.bf16.msra.mxu0 0
        %1023 = vmatprep.subr.bf16.mxu0 0
        %1024 = vmatpush1.bf16.msra.mxu0 0
        %1025 = vmatprep.subr.bf16.mxu0 0
        %1026 = vmatpush1.bf16.msra.mxu0 0
        %1027 = vmatprep.subr.bf16.mxu0 0
        %1028 = vmatpush1.bf16.msra.mxu0 0
        %1029 = vmatprep.subr.bf16.mxu0 0
        %1030 = vmatpush1.bf16.msra.mxu0 0
        %1031 = vmatprep.subr.bf16.mxu0 0
        %1032 = vmatpush1.bf16.msra.mxu0 0
        %1033 = vmatprep.subr.bf16.mxu0 0
        %1034 = vmatpush1.bf16.msra.mxu0 0
        %1035 = vmatprep.subr.bf16.mxu0 0
        %1036 = vmatpush1.bf16.msra.mxu0 0
        %1037 = vmatprep.subr.bf16.mxu0 0
        %1038 = vmatpush1.bf16.msra.mxu0 0
        %1039 = vmatprep.subr.bf16.mxu0 0
        %1040 = vmatpush1.bf16.msra.mxu0 0
        %1041 = vmatprep.subr.bf16.mxu0 0
        %1042 = vmatpush1.bf16.msra.mxu0 0
        %1043 = vmatprep.subr.bf16.mxu0 0
        %1044 = vmatpush1.bf16.msra.mxu0 0
        %1045 = vmatprep.mubr.bf16.mxu0 0
        %1046 = vmatmul.mubr.bf16.gmra.mrb[0].mxu0 %v1008
        %v1047 = vpop.f32.mrb[0].mxu0
        %v1048 = vadd.f32 0.0, %v1047
        %v1049 = vpop.f32.mrb[0].mxu0
        %v1050 = vpop.f32.mrb[0].mxu0
        %v1051 = vpop.f32.mrb[0].mxu0
        %1052 = vdwg.mxu0
        %v1053 = vadd.f32 %v889, %v1048
        %1054 = vrot.lane.b32.xlu0 %v573, 104
        %v1055 = vpop.permute.xlu0 %1054
        %1056 = vrot.lane.b32.xlu0 %v574, 104
        %v1057 = vpop.permute.xlu0 %1056
        %v1059 = vsel %vm575, %v1055, 0
        %v1062 = vsel %vm575, %v1057, 0
        %1064 = vmatprep.subr.bf16.mxu0 0
        %1065 = vmatpush1.bf16.xpose.msra.mxu0 %v1062
        %1066 = vmatprep.subr.bf16.mxu0 0
        %1067 = vmatpush1.bf16.xpose.msra.mxu0 0
        %1068 = vmatprep.subr.bf16.mxu0 0
        %1069 = vmatpush1.bf16.xpose.msra.mxu0 0
        %1070 = vmatprep.subr.bf16.mxu0 0
        %1071 = vmatpush1.bf16.xpose.msra.mxu0 0
        %1072 = vmatprep.subr.bf16.mxu0 0
        %1073 = vmatpush1.bf16.xpose.msra.mxu0 0
        %1074 = vmatprep.subr.bf16.mxu0 0
        %1075 = vmatpush1.bf16.xpose.msra.mxu0 0
        %1076 = vmatprep.subr.bf16.mxu0 0
        %1077 = vmatpush1.bf16.xpose.msra.mxu0 0
        %1078 = vmatprep.subr.bf16.mxu0 0
        %1079 = vmatpush1.bf16.xpose.msra.mxu0 0
        %1080 = vmatprep.subr.bf16.mxu0 0
        %1081 = vmatpush1.bf16.xpose.msra.mxu0 0
        %1082 = vmatprep.subr.bf16.mxu0 0
        %1083 = vmatpush1.bf16.xpose.msra.mxu0 0
        %1084 = vmatprep.subr.bf16.mxu0 0
        %1085 = vmatpush1.bf16.xpose.msra.mxu0 0
        %1086 = vmatprep.subr.bf16.mxu0 0
        %1087 = vmatpush1.bf16.xpose.msra.mxu0 0
        %1088 = vmatprep.subr.bf16.mxu0 0
        %1089 = vmatpush1.bf16.xpose.msra.mxu0 0
        %1090 = vmatprep.subr.bf16.mxu0 0
        %1091 = vmatpush1.bf16.xpose.msra.mxu0 0
        %1092 = vmatprep.subr.bf16.mxu0 0
        %1093 = vmatpush1.bf16.xpose.msra.mxu0 0
        %1094 = vmatprep.subr.bf16.mxu0 0
        %1095 = vmatpush1.bf16.xpose.msra.mxu0 0
        %1096 = vmatprep.mubr.bf16.mxu0 0
        %1097 = vmatmul.mubr.bf16.gmra.mrb[0].mxu0 %v1059
        %v1098 = vpop.f32.mrb[0].mxu0
        %v1099 = vadd.f32 0.0, %v1098
        %v1100 = vpop.f32.mrb[0].mxu0
        %v1101 = vpop.f32.mrb[0].mxu0
        %v1102 = vpop.f32.mrb[0].mxu0
        %1103 = vdwg.mxu0
        %v1104 = vsel %vm622, -1e+20, %v1099
        %v1105 = vsel %vm575, %v1104, -inf
        %1106 = vmax.xlane.f32.xlu0 %v1105
        %v1107 = vpop.xlane.xlu0 %1106
        %v1108 = vsub.f32 %v1104, %v1107
        %v1109 = vmul.f32 %v1108, 1.442695
        %v1110 = vpow.pop %v1109
        %v1111 = vsel %vm575, %v1110, 0.0
        %1112 = vadd.xlane.f32.xlu0 %v1111
        %v1113 = vpop.xlane.xlu0 %1112
        %v1114 = vrcp.pop %v1113
        %v1115 = vmul.f32 %v1110, %v1114
        %v1116 = vpack.c.bf16 %v1115, %v1115
        %1117 = vrot.lane.b32.xlu0 %v574, 72
        %v1118 = vpop.permute.xlu0 %1117
        %v1120 = vsel %vm575, %v1116, 0
        %v1123 = vsel %vm642, %v1118, 0
        %1125 = vmatprep.subr.bf16.mxu0 0
        %1126 = vmatpush1.bf16.msra.mxu0 %v1123
        %1127 = vmatprep.subr.bf16.mxu0 0
        %1128 = vmatpush1.bf16.msra.mxu0 0
        %1129 = vmatprep.subr.bf16.mxu0 0
        %1130 = vmatpush1.bf16.msra.mxu0 0
        %1131 = vmatprep.subr.bf16.mxu0 0
        %1132 = vmatpush1.bf16.msra.mxu0 0
        %1133 = vmatprep.subr.bf16.mxu0 0
        %1134 = vmatpush1.bf16.msra.mxu0 0
        %1135 = vmatprep.subr.bf16.mxu0 0
        %1136 = vmatpush1.bf16.msra.mxu0 0
        %1137 = vmatprep.subr.bf16.mxu0 0
        %1138 = vmatpush1.bf16.msra.mxu0 0
        %1139 = vmatprep.subr.bf16.mxu0 0
        %1140 = vmatpush1.bf16.msra.mxu0 0
        %1141 = vmatprep.subr.bf16.mxu0 0
        %1142 = vmatpush1.bf16.msra.mxu0 0
        %1143 = vmatprep.subr.bf16.mxu0 0
        %1144 = vmatpush1.bf16.msra.mxu0 0
        %1145 = vmatprep.subr.bf16.mxu0 0
        %1146 = vmatpush1.bf16.msra.mxu0 0
        %1147 = vmatprep.subr.bf16.mxu0 0
        %1148 = vmatpush1.bf16.msra.mxu0 0
        %1149 = vmatprep.subr.bf16.mxu0 0
        %1150 = vmatpush1.bf16.msra.mxu0 0
        %1151 = vmatprep.subr.bf16.mxu0 0
        %1152 = vmatpush1.bf16.msra.mxu0 0
        %1153 = vmatprep.subr.bf16.mxu0 0
        %1154 = vmatpush1.bf16.msra.mxu0 0
        %1155 = vmatprep.subr.bf16.mxu0 0
        %1156 = vmatpush1.bf16.msra.mxu0 0
        %1157 = vmatprep.mubr.bf16.mxu0 0
        %1158 = vmatmul.mubr.bf16.gmra.mrb[0].mxu0 %v1120
        %v1159 = vpop.f32.mrb[0].mxu0
        %v1160 = vadd.f32 0.0, %v1159
        %v1161 = vpop.f32.mrb[0].mxu0
        %v1162 = vpop.f32.mrb[0].mxu0
        %v1163 = vpop.f32.mrb[0].mxu0
        %1164 = vdwg.mxu0
        %v1165 = vpack.c.bf16 %v1160, %v1160
        %v1166 = vpack.c.bf16 %v572, %v572
        %v1168 = vsel %vm575, %v1165, 0
        %v1171 = vsel %vm642, %v1166, 0
        %1173 = vmatprep.subr.bf16.mxu0 0
        %1174 = vmatpush1.bf16.msra.mxu0 %v1171
        %1175 = vmatprep.subr.bf16.mxu0 0
        %1176 = vmatpush1.bf16.msra.mxu0 0
        %1177 = vmatprep.subr.bf16.mxu0 0
        %1178 = vmatpush1.bf16.msra.mxu0 0
        %1179 = vmatprep.subr.bf16.mxu0 0
        %1180 = vmatpush1.bf16.msra.mxu0 0
        %1181 = vmatprep.subr.bf16.mxu0 0
        %1182 = vmatpush1.bf16.msra.mxu0 0
        %1183 = vmatprep.subr.bf16.mxu0 0
        %1184 = vmatpush1.bf16.msra.mxu0 0
        %1185 = vmatprep.subr.bf16.mxu0 0
        %1186 = vmatpush1.bf16.msra.mxu0 0
        %1187 = vmatprep.subr.bf16.mxu0 0
        %1188 = vmatpush1.bf16.msra.mxu0 0
        %1189 = vmatprep.subr.bf16.mxu0 0
        %1190 = vmatpush1.bf16.msra.mxu0 0
        %1191 = vmatprep.subr.bf16.mxu0 0
        %1192 = vmatpush1.bf16.msra.mxu0 0
        %1193 = vmatprep.subr.bf16.mxu0 0
        %1194 = vmatpush1.bf16.msra.mxu0 0
        %1195 = vmatprep.subr.bf16.mxu0 0
        %1196 = vmatpush1.bf16.msra.mxu0 0
        %1197 = vmatprep.subr.bf16.mxu0 0
        %1198 = vmatpush1.bf16.msra.mxu0 0
        %1199 = vmatprep.subr.bf16.mxu0 0
        %1200 = vmatpush1.bf16.msra.mxu0 0
        %1201 = vmatprep.subr.bf16.mxu0 0
        %1202 = vmatpush1.bf16.msra.mxu0 0
        %1203 = vmatprep.subr.bf16.mxu0 0
        %1204 = vmatpush1.bf16.msra.mxu0 0
        %1205 = vmatprep.mubr.bf16.mxu0 0
        %1206 = vmatmul.mubr.bf16.gmra.mrb[0].mxu0 %v1168
        %v1207 = vpop.f32.mrb[0].mxu0
        %v1208 = vadd.f32 0.0, %v1207
        %v1209 = vpop.f32.mrb[0].mxu0
        %v1210 = vpop.f32.mrb[0].mxu0
        %v1211 = vpop.f32.mrb[0].mxu0
        %1212 = vdwg.mxu0
        %v1213 = vadd.f32 %v1053, %v1208
        %v1214 = vld [vmem:[%s6] sm:$0x1]
        %v1216 = vlaneseq
        %v1217 = vshrl.u32 %v1216, 7
        %v1218 = vsub.s32 0, %v1217
        %v1219 = vrot.slane %v1214, %v1218
        %v1221 = vadd.f32 %v1213, %v1219
        %v1222 = vadd.f32 %v1221, %v464
        %v1223 = vsel %vm474, %v1222, 0.0
        %1224 = vadd.xlane.f32.xlu0 %v1223
        %v1225 = vpop.xlane.xlu0 %1224
        %v1226 = vrcp.pop 32.0
        %v1227 = vmul.f32 %v1225, %v1226
        %v1228 = vsub.f32 %v1222, %v1227
        %v1229 = vmul.f32 %v1228, %v1228
        %v1230 = vsel %vm474, %v1229, 0.0
        %1231 = vadd.xlane.f32.xlu0 %v1230
        %v1232 = vpop.xlane.xlu0 %1231
        %v1233 = vmul.f32 %v1232, %v1226
        %v1234 = vadd.f32 %v1233, 1e-05
        %v1235 = vrsqrt.pop %v1234
        %v1236 = vmul.f32 %v1228, %v1235
        %v1237 = vld [vmem:[%s7] sm:$0x1]
        %v1239 = vlaneseq
        %v1240 = vshrl.u32 %v1239, 7
        %v1241 = vsub.s32 0, %v1240
        %v1242 = vrot.slane %v1237, %v1241
        %v1244 = vmul.f32 %v1236, %v1242
        %v1245 = vld [vmem:[%s8] sm:$0x1]
        %v1247 = vlaneseq
        %v1248 = vshrl.u32 %v1247, 7
        %v1249 = vsub.s32 0, %v1248
        %v1250 = vrot.slane %v1245, %v1249
        %v1252 = vadd.f32 %v1244, %v1250
        %1253 = vst.msk [vmem:[%s462] sm:$0xff] %vm474, %v1252
        %s1254 = sand.u32 %s243, 1
        %s1255 = scalar_lea.sflag [#allocation4], %s1254
        %s1256 = sand.u32 %s243, 1
        %s1257 = smul.addr %s1256, 8
        %s1258 = scalar_lea.vmem [#allocation13], %s1257
        // Predicated region
        $region81: #{tpu_custom_call.1} parent=55 // pred_check
          %p1259 = pneg %p253
        $region82: #{tpu_custom_call.1} parent=55 // pred_check_branch
          %1261 = sbr.rel (%p1259) target = $region84
        $region83: #{tpu_custom_call.1} parent=55 // pred_region
          %s1263 = ssub.s32 128, 128
          %1264 = vsyncadd %s1255, %s1263
          %s1265 = smul.addr %s31, 128
          %s1266 = scalar_lea.hbm %s9, %s1265
          %s1268 = sshll.u32 %s1258, 4
          %s1269 = int_to_ptr.vmem [resolvable:$true] %s1268
          %1271 = dma.vmem_to_hbm [thread:$0]  %s1269, 128, %s1266, %s1255
        $region84: #{tpu_custom_call.1} parent=55 // pred_fallthru
          _
      $region56: #{tpu_custom_call.1} parent=5 // pred_fallthru
        _
      %p1272 = scmp.le.s32.totalorder 2, %s26
      // Predicated region
      $region85: #{tpu_custom_call.1} parent=5 // pred_check
        %p1273 = pneg %p1272
      $region86: #{tpu_custom_call.1} parent=5 // pred_check_branch
        %1275 = sbr.rel (%p1273) target = $region88
      $region87: #{tpu_custom_call.1} parent=5 // pred_region
        %s1276 = ssub.s32 %s26, 2
        // Predicated region
        $region89: #{tpu_custom_call.1} parent=87 // pred_check
          %p1277 = pneg %p259
        $region90: #{tpu_custom_call.1} parent=87 // pred_check_branch
          %1279 = sbr.rel (%p1277) target = $region92
        $region91: #{tpu_custom_call.1} parent=87 // pred_region
          %s1280 = sand.u32 %s244, 1
          %s1281 = scalar_lea.sflag [#allocation4], %s1280
          %s1282 = sand.u32 %s244, 1
          %s1283 = smul.addr %s1282, 8
          %s1284 = scalar_lea.vmem [#allocation13], %s1283
          %1285 = dma.done %s1281, 128
        $region92: #{tpu_custom_call.1} parent=87 // pred_fallthru
          _
      $region88: #{tpu_custom_call.1} parent=5 // pred_fallthru
        _
    $region6: #{tpu_custom_call.1} parent=1 // loop_footer
      %s30 = sadd.s32 1, %s26
    $region7: #{tpu_custom_call.1} parent=1 // loop_footer_branch
      %25 = sbr.rel target = $region3
    $region8: #{tpu_custom_call.1} parent=1 // loop_exit
      _
    %1286 = vsyncpa [#allocation3], 1
    %s1287 = scalar_lea.sflag [#allocation3], 1
    %1288 = vsyncpa %s1287, 1
    %1289 = vsyncpa [#allocation6], 1
    %s1290 = scalar_lea.sflag [#allocation6], 1
    %1291 = vsyncpa %s1290, 1
    %1292 = vsyncpa [#allocation9], 1
    %1293 = vsyncpa [#allocation12], 1
    %1294 = vsyncpa [#allocation4], 1
    %s1295 = scalar_lea.sflag [#allocation4], 1
    %1296 = vsyncpa %s1295, 1

</llo_original>
